<compile_context>
chip_gen: v7x
topology: tpu7x:2x2x1
jax: 0.10.0
libtpu: 0.0.40
codegen_flags: <defaults>
</compile_context>

<pallas_src>
import jax
import jax.numpy as jnp
import numpy as np
from jax.experimental import pallas as pl
from jax.experimental.pallas import tpu as pltpu

SELU_ALPHA = 1.6732632423543772
SELU_SCALE = 1.0507009873554805
BN_EPS = 1e-5

LANE = 128     # lane-dim pad target (matches v5e MXU width; fine on v6e/v7x)
SUBLANE = 8    # sublane pad target for the batch dim


def _round_up(n, m):
    return ((n + m - 1) // m) * m


def _selu(y):
    # exp only of the non-positive branch values (avoids inf on dead branch).
    return SELU_SCALE * jnp.where(
        y > 0, y, SELU_ALPHA * (jnp.exp(jnp.minimum(y, 0.0)) - 1.0))


# ---------------------------------------------------------------------------
# Fused whole-model kernel (statically unrolled layer loop)
# ---------------------------------------------------------------------------
def _make_fused_kernel(n_x_parts, n_extra_parts, enc_selu, dec_selu,
                       pred_plan, n_params):
    n_in_acts = n_x_parts + n_extra_parts

    def kernel(*refs):
        x_parts = [refs[i][...] for i in range(n_x_parts)]
        extra_parts = [refs[n_x_parts + i][...] for i in range(n_extra_parts)]
        p = refs[n_in_acts:n_in_acts + n_params]
        out_ref = refs[n_in_acts + n_params]
        vhat_ref = refs[n_in_acts + n_params + 1]

        idx = 0

        def linear(parts):
            # y = sum_i parts[i] @ W_i  + b   (concat folded as split weights)
            nonlocal idx
            acc = jnp.dot(parts[0], p[idx][...],
                          preferred_element_type=jnp.float32)
            idx += 1
            for part in parts[1:]:
                acc = acc + jnp.dot(part, p[idx][...],
                                    preferred_element_type=jnp.float32)
                idx += 1
            acc = acc + p[idx][...]
            idx += 1
            return acc

        # ---------------- encoder ----------------
        z = linear(x_parts)
        if enc_selu[0]:
            z = _selu(z)
        for s in enc_selu[1:]:
            z = linear([z])
            if s:
                z = _selu(z)
        z_d = z

        # ---------------- decoder ----------------
        v = z_d
        for s in dec_selu:
            v = linear([v])
            if s:
                v = _selu(v)
        vhat_ref[...] = v.astype(vhat_ref.dtype)

        # ---------------- predictor (Dropout = identity at inference) -------
        cur_parts = [z_d] + extra_parts
        h = None
        for (s, has_bn) in pred_plan:
            h = linear(cur_parts)
            if s:
                h = _selu(h)
            if has_bn:
                h = h * p[idx][...] + p[idx + 1][...]
                idx += 2
            cur_parts = [h]
        out_ref[...] = h.astype(out_ref.dtype)

    return kernel


# ---------------------------------------------------------------------------
# Parameter packing: flatten + zero-pad to lane-dense tiles, split first-layer
# weights so input concatenation happens inside the kernel.
# ---------------------------------------------------------------------------
def _pad_w(w, kpad, npad):
    K, N = w.shape
    return jnp.pad(w.astype(jnp.float32), ((0, kpad - K), (0, npad - N)))


def _pad_v(v, npad):
    (N,) = v.shape
    return jnp.pad(v.astype(jnp.float32), (0, npad - N)).reshape(1, npad)


def pack_fsr_fg_params(params, part_dims, extra_dims):
    flat = []
    enc = params['encoder']
    dec = params['decoder']
    pred = params['predictor']

    enc_selu = [s for (_, s) in enc]
    dec_selu = [s for (_, s) in dec]
    pred_plan = [(s, scale is not None) for (_, _, s, scale, _) in pred]

    def add_split(w, b, dims):
        n_pad = _round_up(w.shape[1], LANE)
        off = 0
        for d in dims:
            flat.append(_pad_w(w[off:off + d], _round_up(d, LANE), n_pad))
            off += d
        assert off == w.shape[0]
        flat.append(_pad_v(b, n_pad))

    def add_plain(w, b):
        n_pad = _round_up(w.shape[1], LANE)
        flat.append(_pad_w(w, _round_up(w.shape[0], LANE), n_pad))
        flat.append(_pad_v(b, n_pad))

    # encoder: first layer split by input parts (fg / mfg)
    (w0, b0), _ = enc[0]
    add_split(w0, b0, part_dims)
    for (w, b), _ in enc[1:]:
        add_plain(w, b)

    # decoder
    for (w, b), _ in dec:
        add_plain(w, b)

    # predictor: first layer split into z_d part + extra (num_features) parts
    w, b, _, scale, shift = pred[0]
    z_dim = w.shape[0] - sum(extra_dims)
    add_split(w, b, [z_dim] + list(extra_dims))
    if scale is not None:
        n_pad = _round_up(w.shape[1], LANE)
        flat.append(_pad_v(scale, n_pad))
        flat.append(_pad_v(shift, n_pad))
    for (w, b, _, scale, shift) in pred[1:]:
        add_plain(w, b)
        if scale is not None:
            n_pad = _round_up(w.shape[1], LANE)
            flat.append(_pad_v(scale, n_pad))
            flat.append(_pad_v(shift, n_pad))

    return flat, enc_selu, dec_selu, pred_plan


# ---------------------------------------------------------------------------
# Deterministic parameter initialization (mirrors the PyTorch module shapes)
# ---------------------------------------------------------------------------
def init_linear(key, in_dim, out_dim):
    kw, kb = jax.random.split(key)
    bound = 1.0 / float(np.sqrt(in_dim))
    w = jax.random.uniform(kw, (in_dim, out_dim), jnp.float32, -bound, bound)
    b = jax.random.uniform(kb, (out_dim,), jnp.float32, -bound, bound)
    return w, b


def init_bn_affine(key, dim):
    # eval-mode BatchNorm1d folded into a per-feature scale / shift
    k1, k2, k3 = jax.random.split(key, 3)
    gamma = jax.random.uniform(k1, (dim,), jnp.float32, 0.5, 1.5)
    beta = jax.random.uniform(k2, (dim,), jnp.float32, -0.5, 0.5)
    running_mean = jax.random.uniform(k3, (dim,), jnp.float32, -0.5, 0.5)
    running_var = jnp.ones((dim,), jnp.float32)
    scale = gamma / jnp.sqrt(running_var + BN_EPS)
    shift = beta - running_mean * scale
    return scale, shift


def init_fsr_fg_params(key, fg_input_dim, mfg_input_dim, num_input_dim,
                       enc_dec_dims, output_dims, num_tasks, method):
    if method == 'FG':
        input_dim = fg_input_dim
    elif method == 'MFG':
        input_dim = mfg_input_dim
    else:  # 'FGR' or 'FGR_desc'
        input_dim = fg_input_dim + mfg_input_dim
    if method != 'FGR_desc':
        fcn_input_dim = enc_dec_dims[-1]
    else:
        fcn_input_dim = num_input_dim + enc_dec_dims[-1]

    keys = iter(jax.random.split(key, 64))
    orig_input_dim = input_dim
    enc_shape = enc_dec_dims[-1]

    # encoder: [Linear + SELU]* , Linear
    encoder = []
    d = input_dim
    for enc_dim in enc_dec_dims[:-1]:
        encoder.append((init_linear(next(keys), d, enc_dim), True))
        d = enc_dim
    encoder.append((init_linear(next(keys), d, enc_shape), False))

    # decoder: [Linear + SELU]* , Linear (mirror)
    decoder = []
    rev = list(reversed(enc_dec_dims))
    d = enc_shape
    for dec_dim in rev[1:]:
        decoder.append((init_linear(next(keys), d, dec_dim), True))
        d = dec_dim
    decoder.append((init_linear(next(keys), d, orig_input_dim), False))

    # predictor: [Linear + SELU + BatchNorm1d]*, Dropout(id), Linear
    predictor = []
    d = fcn_input_dim
    for out_dim in output_dims:
        w, b = init_linear(next(keys), d, out_dim)
        scale, shift = init_bn_affine(next(keys), out_dim)
        predictor.append((w, b, True, scale, shift))
        d = out_dim
    w, b = init_linear(next(keys), d, num_tasks)
    predictor.append((w, b, False, None, None))

    return dict(encoder=encoder, decoder=decoder, predictor=predictor,
                method=method)


# ---------------------------------------------------------------------------
# Forward pass: one pallas_call for the whole model
# ---------------------------------------------------------------------------
def fsr_fg_forward(params, fg=None, mfg=None, num_features=None):
    method = params['method']
    if method == 'FG':
        x_parts = [fg]
    elif method == 'MFG':
        x_parts = [mfg]
    else:  # 'FGR' / 'FGR_desc'
        x_parts = [fg, mfg]
    extra_parts = [num_features] if method == 'FGR_desc' else []

    part_dims = [int(a.shape[1]) for a in x_parts]
    extra_dims = [int(a.shape[1]) for a in extra_parts]

    flat, enc_selu, dec_selu, pred_plan = pack_fsr_fg_params(
        params, part_dims, extra_dims)

    batch = int(x_parts[0].shape[0])
    m_pad = _round_up(max(batch, 1), SUBLANE)

    def pad_act(a):
        B, D = a.shape
        return jnp.pad(a.astype(jnp.float32),
                       ((0, m_pad - B), (0, _round_up(D, LANE) - D)))

    acts = [pad_act(a) for a in x_parts] + [pad_act(a) for a in extra_parts]

    num_tasks = int(params['predictor'][-1][0].shape[1])
    dec_out_dim = int(params['decoder'][-1][0][0].shape[1])

    n_params = len(flat)
    kernel = _make_fused_kernel(len(x_parts), len(extra_parts),
                                enc_selu, dec_selu, pred_plan, n_params)

    # Whole-array VMEM residency, no grid -> no double-buffering, one launch.
    vmem = pl.BlockSpec(memory_space=pltpu.MemorySpace.VMEM)
    out_p, vhat_p = pl.pallas_call(
        kernel,
        out_shape=(
            jax.ShapeDtypeStruct((m_pad, _round_up(num_tasks, LANE)),
                                 jnp.float32),
            jax.ShapeDtypeStruct((m_pad, _round_up(dec_out_dim, LANE)),
                                 jnp.float32),
        ),
        in_specs=[vmem] * (len(acts) + n_params),
        out_specs=(vmem, vmem),
    )(*acts, *flat)

    # Slice the real rows / columns only at the very end (lane-dense stores
    # inside the kernel).
    output = out_p[:batch, :num_tasks]
    v_d_hat = vhat_p[:batch, :dec_out_dim]
    # TODO(synk): training-mode BatchNorm statistics update and Dropout RNG
    # are not implemented (eval-mode semantics only, matching .eval()).
    return output, v_d_hat


# ---------------------------------------------------------------------------
# Pure-JAX reference for correctness check (uses the unpadded params)
# ---------------------------------------------------------------------------
def _selu_ref(x):
    return SELU_SCALE * jnp.where(x > 0, x, SELU_ALPHA * (jnp.exp(x) - 1.0))


def fsr_fg_forward_ref(params, fg, mfg):
    x = jnp.concatenate([fg, mfg], axis=1)
    z = x
    for (w, b), selu in params['encoder']:
        z = z @ w + b
        if selu:
            z = _selu_ref(z)
    z_d = z
    v = z_d
    for (w, b), selu in params['decoder']:
        v = v @ w + b
        if selu:
            v = _selu_ref(v)
    h = z_d
    for (w, b, selu, scale, shift) in params['predictor']:
        h = h @ w + b
        if selu:
            h = _selu_ref(h)
        if scale is not None:
            h = h * scale + shift
    return h, v


# ---------------------------------------------------------------------------
if __name__ == "__main__":
    key = jax.random.PRNGKey(0)
    k_params, k_fg, k_mfg = jax.random.split(key, 3)

    # Small, forward-consistent shapes.
    batch = 8
    fg_input_dim = 32
    mfg_input_dim = 32
    num_input_dim = 8            # unused for method='FGR'
    enc_dec_dims = [48, 16]
    output_dims = [32, 16]
    num_tasks = 4
    method = 'FGR'

    params = init_fsr_fg_params(k_params, fg_input_dim, mfg_input_dim,
                                num_input_dim, enc_dec_dims, output_dims,
                                num_tasks, method)

    fg = jax.random.normal(k_fg, (batch, fg_input_dim), jnp.float32)
    mfg = jax.random.normal(k_mfg, (batch, mfg_input_dim), jnp.float32)

    output, v_d_hat = fsr_fg_forward(params, fg=fg, mfg=mfg)
    output = jax.block_until_ready(output)
    v_d_hat = jax.block_until_ready(v_d_hat)

    out_ref, v_ref = fsr_fg_forward_ref(params, fg, mfg)
    assert output.shape == (batch, num_tasks)
    assert v_d_hat.shape == (batch, fg_input_dim + mfg_input_dim)
    np.testing.assert_allclose(np.asarray(output), np.asarray(out_ref),
                               rtol=1e-5, atol=1e-5)
    np.testing.assert_allclose(np.asarray(v_d_hat), np.asarray(v_ref),
                               rtol=1e-5, atol=1e-5)

    print("KERNEL_OK")
</pallas_src>

<mosaic_0001>
module attributes {stable_mosaic.version = 11 : i64} {
  func.func @kernel(%arg0: memref<8x128xf32, #tpu.memory_space<vmem>>, %arg1: memref<8x128xf32, #tpu.memory_space<vmem>>, %arg2: memref<128x128xf32, #tpu.memory_space<vmem>>, %arg3: memref<128x128xf32, #tpu.memory_space<vmem>>, %arg4: memref<1x128xf32, #tpu.memory_space<vmem>>, %arg5: memref<128x128xf32, #tpu.memory_space<vmem>>, %arg6: memref<1x128xf32, #tpu.memory_space<vmem>>, %arg7: memref<128x128xf32, #tpu.memory_space<vmem>>, %arg8: memref<1x128xf32, #tpu.memory_space<vmem>>, %arg9: memref<128x128xf32, #tpu.memory_space<vmem>>, %arg10: memref<1x128xf32, #tpu.memory_space<vmem>>, %arg11: memref<128x128xf32, #tpu.memory_space<vmem>>, %arg12: memref<1x128xf32, #tpu.memory_space<vmem>>, %arg13: memref<1x128xf32, #tpu.memory_space<vmem>>, %arg14: memref<1x128xf32, #tpu.memory_space<vmem>>, %arg15: memref<128x128xf32, #tpu.memory_space<vmem>>, %arg16: memref<1x128xf32, #tpu.memory_space<vmem>>, %arg17: memref<1x128xf32, #tpu.memory_space<vmem>>, %arg18: memref<1x128xf32, #tpu.memory_space<vmem>>, %arg19: memref<128x128xf32, #tpu.memory_space<vmem>>, %arg20: memref<1x128xf32, #tpu.memory_space<vmem>>, %arg21: memref<8x128xf32, #tpu.memory_space<vmem>>, %arg22: memref<8x128xf32, #tpu.memory_space<vmem>>) attributes {dimension_semantics = [], scalar_prefetch = 0 : i64, scratch_operands = 0 : i64, tpu.core_type = #tpu.core_type<tc>} {
    %c0 = arith.constant 0 : index
    %c0_0 = arith.constant 0 : index
    %0 = vector.load %arg0[%c0, %c0_0] : memref<8x128xf32, #tpu.memory_space<vmem>>, vector<8x128xf32>
    %c0_1 = arith.constant 0 : index
    %c0_2 = arith.constant 0 : index
    %1 = vector.load %arg1[%c0_1, %c0_2] : memref<8x128xf32, #tpu.memory_space<vmem>>, vector<8x128xf32>
    %c0_3 = arith.constant 0 : index
    %c0_4 = arith.constant 0 : index
    %2 = vector.load %arg2[%c0_3, %c0_4] : memref<128x128xf32, #tpu.memory_space<vmem>>, vector<128x128xf32>
    %cst = arith.constant dense<0.000000e+00> : vector<8x128xf32>
    %3 = tpu.matmul %0, %2, %cst {dimension_numbers = #tpu.dot_dimension_numbers<[1], [0], [0], [1], [0, 0, 1, 1], [], []>} : vector<8x128xf32>, vector<128x128xf32>, vector<8x128xf32> -> vector<8x128xf32>
    %c0_5 = arith.constant 0 : index
    %c0_6 = arith.constant 0 : index
    %4 = vector.load %arg3[%c0_5, %c0_6] : memref<128x128xf32, #tpu.memory_space<vmem>>, vector<128x128xf32>
    %cst_7 = arith.constant dense<0.000000e+00> : vector<8x128xf32>
    %5 = tpu.matmul %1, %4, %cst_7 {dimension_numbers = #tpu.dot_dimension_numbers<[1], [0], [0], [1], [0, 0, 1, 1], [], []>} : vector<8x128xf32>, vector<128x128xf32>, vector<8x128xf32> -> vector<8x128xf32>
    %6 = arith.addf %3, %5 : vector<8x128xf32>
    %c0_8 = arith.constant 0 : index
    %c0_9 = arith.constant 0 : index
    %7 = vector.load %arg4[%c0_8, %c0_9] : memref<1x128xf32, #tpu.memory_space<vmem>>, vector<1x128xf32>
    %8 = vector.broadcast %7 : vector<1x128xf32> to vector<8x128xf32>
    %9 = arith.addf %6, %8 : vector<8x128xf32>
    %cst_10 = arith.constant 0.000000e+00 : f32
    %10 = vector.broadcast %cst_10 : f32 to vector<8x128xf32>
    %11 = arith.cmpf ogt, %9, %10 : vector<8x128xf32>
    %cst_11 = arith.constant 0.000000e+00 : f32
    %12 = vector.broadcast %cst_11 : f32 to vector<8x128xf32>
    %13 = arith.minimumf %9, %12 : vector<8x128xf32>
    %14 = math.exp %13 : vector<8x128xf32>
    %cst_12 = arith.constant 1.000000e+00 : f32
    %15 = vector.broadcast %cst_12 : f32 to vector<8x128xf32>
    %16 = arith.subf %14, %15 : vector<8x128xf32>
    %cst_13 = arith.constant 1.67326319 : f32
    %17 = vector.broadcast %cst_13 : f32 to vector<8x128xf32>
    %18 = arith.mulf %17, %16 : vector<8x128xf32>
    %19 = arith.select %11, %9, %18 : vector<8x128xi1>, vector<8x128xf32>
    %cst_14 = arith.constant 1.05070102 : f32
    %20 = vector.broadcast %cst_14 : f32 to vector<8x128xf32>
    %21 = arith.mulf %20, %19 : vector<8x128xf32>
    %c0_15 = arith.constant 0 : index
    %c0_16 = arith.constant 0 : index
    %22 = vector.load %arg5[%c0_15, %c0_16] : memref<128x128xf32, #tpu.memory_space<vmem>>, vector<128x128xf32>
    %cst_17 = arith.constant dense<0.000000e+00> : vector<8x128xf32>
    %23 = tpu.matmul %21, %22, %cst_17 {dimension_numbers = #tpu.dot_dimension_numbers<[1], [0], [0], [1], [0, 0, 1, 1], [], []>} : vector<8x128xf32>, vector<128x128xf32>, vector<8x128xf32> -> vector<8x128xf32>
    %c0_18 = arith.constant 0 : index
    %c0_19 = arith.constant 0 : index
    %24 = vector.load %arg6[%c0_18, %c0_19] : memref<1x128xf32, #tpu.memory_space<vmem>>, vector<1x128xf32>
    %25 = vector.broadcast %24 : vector<1x128xf32> to vector<8x128xf32>
    %26 = arith.addf %23, %25 : vector<8x128xf32>
    %c0_20 = arith.constant 0 : index
    %c0_21 = arith.constant 0 : index
    %27 = vector.load %arg7[%c0_20, %c0_21] : memref<128x128xf32, #tpu.memory_space<vmem>>, vector<128x128xf32>
    %cst_22 = arith.constant dense<0.000000e+00> : vector<8x128xf32>
    %28 = tpu.matmul %26, %27, %cst_22 {dimension_numbers = #tpu.dot_dimension_numbers<[1], [0], [0], [1], [0, 0, 1, 1], [], []>} : vector<8x128xf32>, vector<128x128xf32>, vector<8x128xf32> -> vector<8x128xf32>
    %c0_23 = arith.constant 0 : index
    %c0_24 = arith.constant 0 : index
    %29 = vector.load %arg8[%c0_23, %c0_24] : memref<1x128xf32, #tpu.memory_space<vmem>>, vector<1x128xf32>
    %30 = vector.broadcast %29 : vector<1x128xf32> to vector<8x128xf32>
    %31 = arith.addf %28, %30 : vector<8x128xf32>
    %cst_25 = arith.constant 0.000000e+00 : f32
    %32 = vector.broadcast %cst_25 : f32 to vector<8x128xf32>
    %33 = arith.cmpf ogt, %31, %32 : vector<8x128xf32>
    %cst_26 = arith.constant 0.000000e+00 : f32
    %34 = vector.broadcast %cst_26 : f32 to vector<8x128xf32>
    %35 = arith.minimumf %31, %34 : vector<8x128xf32>
    %36 = math.exp %35 : vector<8x128xf32>
    %cst_27 = arith.constant 1.000000e+00 : f32
    %37 = vector.broadcast %cst_27 : f32 to vector<8x128xf32>
    %38 = arith.subf %36, %37 : vector<8x128xf32>
    %cst_28 = arith.constant 1.67326319 : f32
    %39 = vector.broadcast %cst_28 : f32 to vector<8x128xf32>
    %40 = arith.mulf %39, %38 : vector<8x128xf32>
    %41 = arith.select %33, %31, %40 : vector<8x128xi1>, vector<8x128xf32>
    %cst_29 = arith.constant 1.05070102 : f32
    %42 = vector.broadcast %cst_29 : f32 to vector<8x128xf32>
    %43 = arith.mulf %42, %41 : vector<8x128xf32>
    %c0_30 = arith.constant 0 : index
    %c0_31 = arith.constant 0 : index
    %44 = vector.load %arg9[%c0_30, %c0_31] : memref<128x128xf32, #tpu.memory_space<vmem>>, vector<128x128xf32>
    %cst_32 = arith.constant dense<0.000000e+00> : vector<8x128xf32>
    %45 = tpu.matmul %43, %44, %cst_32 {dimension_numbers = #tpu.dot_dimension_numbers<[1], [0], [0], [1], [0, 0, 1, 1], [], []>} : vector<8x128xf32>, vector<128x128xf32>, vector<8x128xf32> -> vector<8x128xf32>
    %c0_33 = arith.constant 0 : index
    %c0_34 = arith.constant 0 : index
    %46 = vector.load %arg10[%c0_33, %c0_34] : memref<1x128xf32, #tpu.memory_space<vmem>>, vector<1x128xf32>
    %47 = vector.broadcast %46 : vector<1x128xf32> to vector<8x128xf32>
    %48 = arith.addf %45, %47 : vector<8x128xf32>
    %c0_35 = arith.constant 0 : index
    %c0_36 = arith.constant 0 : index
    %49 = vector.load %arg22[%c0_35, %c0_36] : memref<8x128xf32, #tpu.memory_space<vmem>>, vector<8x128xf32>
    tpu.vector_store %arg22[%c0_35, %c0_36], %48 {strides = array<i32>} : memref<8x128xf32, #tpu.memory_space<vmem>>, vector<8x128xf32>,
    %c0_37 = arith.constant 0 : index
    %c0_38 = arith.constant 0 : index
    %50 = vector.load %arg11[%c0_37, %c0_38] : memref<128x128xf32, #tpu.memory_space<vmem>>, vector<128x128xf32>
    %cst_39 = arith.constant dense<0.000000e+00> : vector<8x128xf32>
    %51 = tpu.matmul %26, %50, %cst_39 {dimension_numbers = #tpu.dot_dimension_numbers<[1], [0], [0], [1], [0, 0, 1, 1], [], []>} : vector<8x128xf32>, vector<128x128xf32>, vector<8x128xf32> -> vector<8x128xf32>
    %c0_40 = arith.constant 0 : index
    %c0_41 = arith.constant 0 : index
    %52 = vector.load %arg12[%c0_40, %c0_41] : memref<1x128xf32, #tpu.memory_space<vmem>>, vector<1x128xf32>
    %53 = vector.broadcast %52 : vector<1x128xf32> to vector<8x128xf32>
    %54 = arith.addf %51, %53 : vector<8x128xf32>
    %cst_42 = arith.constant 0.000000e+00 : f32
    %55 = vector.broadcast %cst_42 : f32 to vector<8x128xf32>
    %56 = arith.cmpf ogt, %54, %55 : vector<8x128xf32>
    %cst_43 = arith.constant 0.000000e+00 : f32
    %57 = vector.broadcast %cst_43 : f32 to vector<8x128xf32>
    %58 = arith.minimumf %54, %57 : vector<8x128xf32>
    %59 = math.exp %58 : vector<8x128xf32>
    %cst_44 = arith.constant 1.000000e+00 : f32
    %60 = vector.broadcast %cst_44 : f32 to vector<8x128xf32>
    %61 = arith.subf %59, %60 : vector<8x128xf32>
    %cst_45 = arith.constant 1.67326319 : f32
    %62 = vector.broadcast %cst_45 : f32 to vector<8x128xf32>
    %63 = arith.mulf %62, %61 : vector<8x128xf32>
    %64 = arith.select %56, %54, %63 : vector<8x128xi1>, vector<8x128xf32>
    %cst_46 = arith.constant 1.05070102 : f32
    %65 = vector.broadcast %cst_46 : f32 to vector<8x128xf32>
    %66 = arith.mulf %65, %64 : vector<8x128xf32>
    %c0_47 = arith.constant 0 : index
    %c0_48 = arith.constant 0 : index
    %67 = vector.load %arg13[%c0_47, %c0_48] : memref<1x128xf32, #tpu.memory_space<vmem>>, vector<1x128xf32>
    %68 = vector.broadcast %67 : vector<1x128xf32> to vector<8x128xf32>
    %69 = arith.mulf %66, %68 : vector<8x128xf32>
    %c0_49 = arith.constant 0 : index
    %c0_50 = arith.constant 0 : index
    %70 = vector.load %arg14[%c0_49, %c0_50] : memref<1x128xf32, #tpu.memory_space<vmem>>, vector<1x128xf32>
    %71 = vector.broadcast %70 : vector<1x128xf32> to vector<8x128xf32>
    %72 = arith.addf %69, %71 : vector<8x128xf32>
    %c0_51 = arith.constant 0 : index
    %c0_52 = arith.constant 0 : index
    %73 = vector.load %arg15[%c0_51, %c0_52] : memref<128x128xf32, #tpu.memory_space<vmem>>, vector<128x128xf32>
    %cst_53 = arith.constant dense<0.000000e+00> : vector<8x128xf32>
    %74 = tpu.matmul %72, %73, %cst_53 {dimension_numbers = #tpu.dot_dimension_numbers<[1], [0], [0], [1], [0, 0, 1, 1], [], []>} : vector<8x128xf32>, vector<128x128xf32>, vector<8x128xf32> -> vector<8x128xf32>
    %c0_54 = arith.constant 0 : index
    %c0_55 = arith.constant 0 : index
    %75 = vector.load %arg16[%c0_54, %c0_55] : memref<1x128xf32, #tpu.memory_space<vmem>>, vector<1x128xf32>
    %76 = vector.broadcast %75 : vector<1x128xf32> to vector<8x128xf32>
    %77 = arith.addf %74, %76 : vector<8x128xf32>
    %cst_56 = arith.constant 0.000000e+00 : f32
    %78 = vector.broadcast %cst_56 : f32 to vector<8x128xf32>
    %79 = arith.cmpf ogt, %77, %78 : vector<8x128xf32>
    %cst_57 = arith.constant 0.000000e+00 : f32
    %80 = vector.broadcast %cst_57 : f32 to vector<8x128xf32>
    %81 = arith.minimumf %77, %80 : vector<8x128xf32>
    %82 = math.exp %81 : vector<8x128xf32>
    %cst_58 = arith.constant 1.000000e+00 : f32
    %83 = vector.broadcast %cst_58 : f32 to vector<8x128xf32>
    %84 = arith.subf %82, %83 : vector<8x128xf32>
    %cst_59 = arith.constant 1.67326319 : f32
    %85 = vector.broadcast %cst_59 : f32 to vector<8x128xf32>
    %86 = arith.mulf %85, %84 : vector<8x128xf32>
    %87 = arith.select %79, %77, %86 : vector<8x128xi1>, vector<8x128xf32>
    %cst_60 = arith.constant 1.05070102 : f32
    %88 = vector.broadcast %cst_60 : f32 to vector<8x128xf32>
    %89 = arith.mulf %88, %87 : vector<8x128xf32>
    %c0_61 = arith.constant 0 : index
    %c0_62 = arith.constant 0 : index
    %90 = vector.load %arg17[%c0_61, %c0_62] : memref<1x128xf32, #tpu.memory_space<vmem>>, vector<1x128xf32>
    %91 = vector.broadcast %90 : vector<1x128xf32> to vector<8x128xf32>
    %92 = arith.mulf %89, %91 : vector<8x128xf32>
    %c0_63 = arith.constant 0 : index
    %c0_64 = arith.constant 0 : index
    %93 = vector.load %arg18[%c0_63, %c0_64] : memref<1x128xf32, #tpu.memory_space<vmem>>, vector<1x128xf32>
    %94 = vector.broadcast %93 : vector<1x128xf32> to vector<8x128xf32>
    %95 = arith.addf %92, %94 : vector<8x128xf32>
    %c0_65 = arith.constant 0 : index
    %c0_66 = arith.constant 0 : index
    %96 = vector.load %arg19[%c0_65, %c0_66] : memref<128x128xf32, #tpu.memory_space<vmem>>, vector<128x128xf32>
    %cst_67 = arith.constant dense<0.000000e+00> : vector<8x128xf32>
    %97 = tpu.matmul %95, %96, %cst_67 {dimension_numbers = #tpu.dot_dimension_numbers<[1], [0], [0], [1], [0, 0, 1, 1], [], []>} : vector<8x128xf32>, vector<128x128xf32>, vector<8x128xf32> -> vector<8x128xf32>
    %c0_68 = arith.constant 0 : index
    %c0_69 = arith.constant 0 : index
    %98 = vector.load %arg20[%c0_68, %c0_69] : memref<1x128xf32, #tpu.memory_space<vmem>>, vector<1x128xf32>
    %99 = vector.broadcast %98 : vector<1x128xf32> to vector<8x128xf32>
    %100 = arith.addf %97, %99 : vector<8x128xf32>
    %c0_70 = arith.constant 0 : index
    %c0_71 = arith.constant 0 : index
    %101 = vector.load %arg21[%c0_70, %c0_71] : memref<8x128xf32, #tpu.memory_space<vmem>>, vector<8x128xf32>
    tpu.vector_store %arg21[%c0_70, %c0_71], %100 {strides = array<i32>} : memref<8x128xf32, #tpu.memory_space<vmem>>, vector<8x128xf32>,
    return
  }
}

</mosaic_0001>

<llo_original>
// kernel: tpu_custom_call.1
$region0: #{tpu_custom_call.1}
  #allocation0 [shape = 'u32[]', space=smem, size = 0x4, offset = 0x4, fixed_abs, tag = 'smem constant byte address 0x4 - core index']
  #allocation1 [shape = 'u32[144,128]{1,0:T(1,128)}', space=vmem, size = 0x12000, scoped, tag = 'internal scratch']
  %s0 = inlined_call_operand.hbm [shape: f32[8,128], index: 0, kind: input, shape index: {}]
  %s1 = inlined_call_operand.hbm [shape: f32[8,128], index: 1, kind: input, shape index: {}]
  %s2 = inlined_call_operand.hbm [shape: f32[128,128], index: 2, kind: input, shape index: {}]
  %s3 = inlined_call_operand.hbm [shape: f32[128,128], index: 3, kind: input, shape index: {}]
  %s4 = inlined_call_operand.vmem [shape: f32[1,128], index: 4, kind: input, shape index: {}]
  %s5 = inlined_call_operand.hbm [shape: f32[128,128], index: 5, kind: input, shape index: {}]
  %s6 = inlined_call_operand.vmem [shape: f32[1,128], index: 6, kind: input, shape index: {}]
  %s7 = inlined_call_operand.hbm [shape: f32[128,128], index: 7, kind: input, shape index: {}]
  %s8 = inlined_call_operand.vmem [shape: f32[1,128], index: 8, kind: input, shape index: {}]
  %s9 = inlined_call_operand.hbm [shape: f32[128,128], index: 9, kind: input, shape index: {}]
  %s10 = inlined_call_operand.vmem [shape: f32[1,128], index: 10, kind: input, shape index: {}]
  %s11 = inlined_call_operand.hbm [shape: f32[128,128], index: 11, kind: input, shape index: {}]
  %s12 = inlined_call_operand.vmem [shape: f32[1,128], index: 12, kind: input, shape index: {}]
  %s13 = inlined_call_operand.vmem [shape: f32[1,128], index: 13, kind: input, shape index: {}]
  %s14 = inlined_call_operand.vmem [shape: f32[1,128], index: 14, kind: input, shape index: {}]
  %s15 = inlined_call_operand.hbm [shape: f32[128,128], index: 15, kind: input, shape index: {}]
  %s16 = inlined_call_operand.vmem [shape: f32[1,128], index: 16, kind: input, shape index: {}]
  %s17 = inlined_call_operand.vmem [shape: f32[1,128], index: 17, kind: input, shape index: {}]
  %s18 = inlined_call_operand.vmem [shape: f32[1,128], index: 18, kind: input, shape index: {}]
  %s19 = inlined_call_operand.hbm [shape: f32[128,128], index: 19, kind: input, shape index: {}]
  %s20 = inlined_call_operand.vmem [shape: f32[1,128], index: 20, kind: input, shape index: {}]
  %s21 = inlined_call_operand.hbm [shape: f32[8,128], index: 21, kind: output, shape index: {0}]
  %s22 = inlined_call_operand.hbm [shape: f32[8,128], index: 22, kind: output, shape index: {1}]
  %23 = xla_tuple %s21, %s22
  %s24 = sld [smem:[#allocation0]]
  $region142: #{tpu_custom_call.1} parent=0
    _
  %s26 = ssub.s32 1, %s24
  %s27 = scalar_select 0, %s26, %s24
  $region1: #{tpu_custom_call.1} parent=0
    #allocation2 [shape = 'u8[4096]{0}', space=vmem, size = 0x1000, scoped, tag = 'input window, operand 0, single buffered']
    #allocation3 [shape = 's32[1]{0}', space=sflag, size = 0x4, scoped, tag = 'scoped memory for tpu_custom_call.1']
    #allocation4 [shape = 's32[1]{0}', space=sflag, size = 0x4, scoped, tag = 'scoped memory for tpu_custom_call.1']
    #allocation5 [shape = 'u8[4096]{0}', space=vmem, size = 0x1000, scoped, tag = 'input window, operand 1, single buffered']
    #allocation6 [shape = 's32[1]{0}', space=sflag, size = 0x4, scoped, tag = 'scoped memory for tpu_custom_call.1']
    #allocation7 [shape = 'u8[65536]{0}', space=vmem, size = 0x10000, scoped, tag = 'input window, operand 2, single buffered']
    #allocation8 [shape = 'u8[65536]{0}', space=vmem, size = 0x10000, scoped, tag = 'input window, operand 3, single buffered']
    #allocation9 [shape = 's32[1]{0}', space=sflag, size = 0x4, scoped, tag = 'scoped memory for tpu_custom_call.1']
    #allocation10 [shape = 'u8[65536]{0}', space=vmem, size = 0x10000, scoped, tag = 'input window, operand 5, single buffered']
    #allocation11 [shape = 'u8[65536]{0}', space=vmem, size = 0x10000, scoped, tag = 'input window, operand 7, single buffered']
    #allocation12 [shape = 's32[1]{0}', space=sflag, size = 0x4, scoped, tag = 'scoped memory for tpu_custom_call.1']
    #allocation13 [shape = 'u8[65536]{0}', space=vmem, size = 0x10000, scoped, tag = 'input window, operand 9, single buffered']
    #allocation14 [shape = 'u8[65536]{0}', space=vmem, size = 0x10000, scoped, tag = 'input window, operand 11, single buffered']
    #allocation15 [shape = 's32[1]{0}', space=sflag, size = 0x4, scoped, tag = 'scoped memory for tpu_custom_call.1']
    #allocation16 [shape = 'u8[65536]{0}', space=vmem, size = 0x10000, scoped, tag = 'input window, operand 15, single buffered']
    #allocation17 [shape = 'u8[65536]{0}', space=vmem, size = 0x10000, scoped, tag = 'input window, operand 19, single buffered']
    #allocation18 [shape = 's32[1]{0}', space=sflag, size = 0x4, scoped, tag = 'scoped memory for tpu_custom_call.1']
    #allocation19 [shape = 'u8[4096]{0}', space=vmem, size = 0x1000, scoped, tag = 'output window, operand 0, single buffered']
    #allocation20 [shape = 'u8[4096]{0}', space=vmem, size = 0x1000, scoped, tag = 'output window, operand 1, single buffered']
    #allocation21 [shape = 's32[1]{0}', space=sflag, size = 0x4, scoped, tag = 'scoped memory for tpu_custom_call.1']
    %28 = vsyncpa [#allocation3], 0
    %29 = vsyncpa [#allocation6], 0
    %30 = vsyncpa [#allocation9], 0
    %31 = vsyncpa [#allocation12], 0
    %32 = vsyncpa [#allocation15], 0
    %33 = vsyncpa [#allocation18], 0
    %34 = vsyncpa [#allocation4], 0
    %35 = vsyncpa [#allocation21], 0
    // Predicated region
    $region2: #{tpu_custom_call.1} parent=1 // pred_check
      _
    $region3: #{tpu_custom_call.1} parent=1 // pred_check_branch
      %37 = sbr.rel (0) target = $region5
    $region4: #{tpu_custom_call.1} parent=1 // pred_region
      %s39 = ssub.s32 128, 128
      %40 = vsyncadd [#allocation3], %s39
      %s42 = sshll.u32 [#allocation2], 4
      %s43 = int_to_ptr.vmem [resolvable:$true] %s42
      %45 = dma.hbm_to_vmem [thread:$0]  %s0, 128, %s43, [#allocation3]
    $region5: #{tpu_custom_call.1} parent=1 // pred_fallthru
      _
    // Predicated region
    $region6: #{tpu_custom_call.1} parent=1 // pred_check
      _
    $region7: #{tpu_custom_call.1} parent=1 // pred_check_branch
      %47 = sbr.rel (0) target = $region9
    $region8: #{tpu_custom_call.1} parent=1 // pred_region
      %s49 = ssub.s32 128, 128
      %50 = vsyncadd [#allocation6], %s49
      %s52 = sshll.u32 [#allocation5], 4
      %s53 = int_to_ptr.vmem [resolvable:$true] %s52
      %55 = dma.hbm_to_vmem [thread:$0]  %s1, 128, %s53, [#allocation6]
    $region9: #{tpu_custom_call.1} parent=1 // pred_fallthru
      _
    // Predicated region
    $region10: #{tpu_custom_call.1} parent=1 // pred_check
      _
    $region11: #{tpu_custom_call.1} parent=1 // pred_check_branch
      %57 = sbr.rel (0) target = $region13
    $region12: #{tpu_custom_call.1} parent=1 // pred_region
      %s59 = ssub.s32 2048, 2048
      %60 = vsyncadd [#allocation6], %s59
      %s61 = sshll.u32 [#allocation7], 4
      %s62 = int_to_ptr.vmem [resolvable:$true] %s61
      %67 = dma.hbm_to_vmem [thread:$0]  %s2, 2048, %s62, [#allocation6], 128, 128, 8
    $region13: #{tpu_custom_call.1} parent=1 // pred_fallthru
      _
    // Predicated region
    $region14: #{tpu_custom_call.1} parent=1 // pred_check
      _
    $region15: #{tpu_custom_call.1} parent=1 // pred_check_branch
      %69 = sbr.rel (0) target = $region17
    $region16: #{tpu_custom_call.1} parent=1 // pred_region
      %s71 = ssub.s32 2048, 2048
      %72 = vsyncadd [#allocation9], %s71
      %s73 = sshll.u32 [#allocation8], 4
      %s74 = int_to_ptr.vmem [resolvable:$true] %s73
      %79 = dma.hbm_to_vmem [thread:$0]  %s3, 2048, %s74, [#allocation9], 128, 128, 8
    $region17: #{tpu_custom_call.1} parent=1 // pred_fallthru
      _
    // Predicated region
    $region18: #{tpu_custom_call.1} parent=1 // pred_check
      _
    $region19: #{tpu_custom_call.1} parent=1 // pred_check_branch
      %81 = sbr.rel (0) target = $region21
    $region20: #{tpu_custom_call.1} parent=1 // pred_region
      _
    $region21: #{tpu_custom_call.1} parent=1 // pred_fallthru
      _
    // Predicated region
    $region22: #{tpu_custom_call.1} parent=1 // pred_check
      _
    $region23: #{tpu_custom_call.1} parent=1 // pred_check_branch
      %83 = sbr.rel (0) target = $region25
    $region24: #{tpu_custom_call.1} parent=1 // pred_region
      %s85 = ssub.s32 2048, 2048
      %86 = vsyncadd [#allocation9], %s85
      %s87 = sshll.u32 [#allocation10], 4
      %s88 = int_to_ptr.vmem [resolvable:$true] %s87
      %93 = dma.hbm_to_vmem [thread:$0]  %s5, 2048, %s88, [#allocation9], 128, 128, 8
    $region25: #{tpu_custom_call.1} parent=1 // pred_fallthru
      _
    // Predicated region
    $region26: #{tpu_custom_call.1} parent=1 // pred_check
      _
    $region27: #{tpu_custom_call.1} parent=1 // pred_check_branch
      %95 = sbr.rel (0) target = $region29
    $region28: #{tpu_custom_call.1} parent=1 // pred_region
      _
    $region29: #{tpu_custom_call.1} parent=1 // pred_fallthru
      _
    // Predicated region
    $region30: #{tpu_custom_call.1} parent=1 // pred_check
      _
    $region31: #{tpu_custom_call.1} parent=1 // pred_check_branch
      %97 = sbr.rel (0) target = $region33
    $region32: #{tpu_custom_call.1} parent=1 // pred_region
      %s99 = ssub.s32 2048, 2048
      %100 = vsyncadd [#allocation12], %s99
      %s101 = sshll.u32 [#allocation11], 4
      %s102 = int_to_ptr.vmem [resolvable:$true] %s101
      %107 = dma.hbm_to_vmem [thread:$0]  %s7, 2048, %s102, [#allocation12], 128, 128, 8
    $region33: #{tpu_custom_call.1} parent=1 // pred_fallthru
      _
    // Predicated region
    $region34: #{tpu_custom_call.1} parent=1 // pred_check
      _
    $region35: #{tpu_custom_call.1} parent=1 // pred_check_branch
      %109 = sbr.rel (0) target = $region37
    $region36: #{tpu_custom_call.1} parent=1 // pred_region
      _
    $region37: #{tpu_custom_call.1} parent=1 // pred_fallthru
      _
    // Predicated region
    $region38: #{tpu_custom_call.1} parent=1 // pred_check
      _
    $region39: #{tpu_custom_call.1} parent=1 // pred_check_branch
      %111 = sbr.rel (0) target = $region41
    $region40: #{tpu_custom_call.1} parent=1 // pred_region
      %s113 = ssub.s32 2048, 2048
      %114 = vsyncadd [#allocation12], %s113
      %s115 = sshll.u32 [#allocation13], 4
      %s116 = int_to_ptr.vmem [resolvable:$true] %s115
      %121 = dma.hbm_to_vmem [thread:$0]  %s9, 2048, %s116, [#allocation12], 128, 128, 8
    $region41: #{tpu_custom_call.1} parent=1 // pred_fallthru
      _
    // Predicated region
    $region42: #{tpu_custom_call.1} parent=1 // pred_check
      _
    $region43: #{tpu_custom_call.1} parent=1 // pred_check_branch
      %123 = sbr.rel (0) target = $region45
    $region44: #{tpu_custom_call.1} parent=1 // pred_region
      _
    $region45: #{tpu_custom_call.1} parent=1 // pred_fallthru
      _
    // Predicated region
    $region46: #{tpu_custom_call.1} parent=1 // pred_check
      _
    $region47: #{tpu_custom_call.1} parent=1 // pred_check_branch
      %125 = sbr.rel (0) target = $region49
    $region48: #{tpu_custom_call.1} parent=1 // pred_region
      %s127 = ssub.s32 2048, 2048
      %128 = vsyncadd [#allocation15], %s127
      %s129 = sshll.u32 [#allocation14], 4
      %s130 = int_to_ptr.vmem [resolvable:$true] %s129
      %135 = dma.hbm_to_vmem [thread:$0]  %s11, 2048, %s130, [#allocation15], 128, 128, 8
    $region49: #{tpu_custom_call.1} parent=1 // pred_fallthru
      _
    // Predicated region
    $region50: #{tpu_custom_call.1} parent=1 // pred_check
      _
    $region51: #{tpu_custom_call.1} parent=1 // pred_check_branch
      %137 = sbr.rel (0) target = $region53
    $region52: #{tpu_custom_call.1} parent=1 // pred_region
      _
    $region53: #{tpu_custom_call.1} parent=1 // pred_fallthru
      _
    // Predicated region
    $region54: #{tpu_custom_call.1} parent=1 // pred_check
      _
    $region55: #{tpu_custom_call.1} parent=1 // pred_check_branch
      %139 = sbr.rel (0) target = $region57
    $region56: #{tpu_custom_call.1} parent=1 // pred_region
      _
    $region57: #{tpu_custom_call.1} parent=1 // pred_fallthru
      _
    // Predicated region
    $region58: #{tpu_custom_call.1} parent=1 // pred_check
      _
    $region59: #{tpu_custom_call.1} parent=1 // pred_check_branch
      %141 = sbr.rel (0) target = $region61
    $region60: #{tpu_custom_call.1} parent=1 // pred_region
      _
    $region61: #{tpu_custom_call.1} parent=1 // pred_fallthru
      _
    // Predicated region
    $region62: #{tpu_custom_call.1} parent=1 // pred_check
      _
    $region63: #{tpu_custom_call.1} parent=1 // pred_check_branch
      %143 = sbr.rel (0) target = $region65
    $region64: #{tpu_custom_call.1} parent=1 // pred_region
      %s145 = ssub.s32 2048, 2048
      %146 = vsyncadd [#allocation15], %s145
      %s147 = sshll.u32 [#allocation16], 4
      %s148 = int_to_ptr.vmem [resolvable:$true] %s147
      %153 = dma.hbm_to_vmem [thread:$0]  %s15, 2048, %s148, [#allocation15], 128, 128, 8
    $region65: #{tpu_custom_call.1} parent=1 // pred_fallthru
      _
    // Predicated region
    $region66: #{tpu_custom_call.1} parent=1 // pred_check
      _
    $region67: #{tpu_custom_call.1} parent=1 // pred_check_branch
      %155 = sbr.rel (0) target = $region69
    $region68: #{tpu_custom_call.1} parent=1 // pred_region
      _
    $region69: #{tpu_custom_call.1} parent=1 // pred_fallthru
      _
    // Predicated region
    $region70: #{tpu_custom_call.1} parent=1 // pred_check
      _
    $region71: #{tpu_custom_call.1} parent=1 // pred_check_branch
      %157 = sbr.rel (0) target = $region73
    $region72: #{tpu_custom_call.1} parent=1 // pred_region
      _
    $region73: #{tpu_custom_call.1} parent=1 // pred_fallthru
      _
    // Predicated region
    $region74: #{tpu_custom_call.1} parent=1 // pred_check
      _
    $region75: #{tpu_custom_call.1} parent=1 // pred_check_branch
      %159 = sbr.rel (0) target = $region77
    $region76: #{tpu_custom_call.1} parent=1 // pred_region
      _
    $region77: #{tpu_custom_call.1} parent=1 // pred_fallthru
      _
    // Predicated region
    $region78: #{tpu_custom_call.1} parent=1 // pred_check
      _
    $region79: #{tpu_custom_call.1} parent=1 // pred_check_branch
      %161 = sbr.rel (0) target = $region81
    $region80: #{tpu_custom_call.1} parent=1 // pred_region
      %s163 = ssub.s32 2048, 2048
      %164 = vsyncadd [#allocation18], %s163
      %s165 = sshll.u32 [#allocation17], 4
      %s166 = int_to_ptr.vmem [resolvable:$true] %s165
      %171 = dma.hbm_to_vmem [thread:$0]  %s19, 2048, %s166, [#allocation18], 128, 128, 8
    $region81: #{tpu_custom_call.1} parent=1 // pred_fallthru
      _
    // Predicated region
    $region82: #{tpu_custom_call.1} parent=1 // pred_check
      _
    $region83: #{tpu_custom_call.1} parent=1 // pred_check_branch
      %173 = sbr.rel (0) target = $region85
    $region84: #{tpu_custom_call.1} parent=1 // pred_region
      _
    $region85: #{tpu_custom_call.1} parent=1 // pred_fallthru
      _
    // Predicated region
    $region86: #{tpu_custom_call.1} parent=1 // pred_check
      _
    $region87: #{tpu_custom_call.1} parent=1 // pred_check_branch
      %175 = sbr.rel (0) target = $region89
    $region88: #{tpu_custom_call.1} parent=1 // pred_region
      %176 = dma.done [#allocation3], 128
    $region89: #{tpu_custom_call.1} parent=1 // pred_fallthru
      _
    // Predicated region
    $region90: #{tpu_custom_call.1} parent=1 // pred_check
      _
    $region91: #{tpu_custom_call.1} parent=1 // pred_check_branch
      %178 = sbr.rel (0) target = $region93
    $region92: #{tpu_custom_call.1} parent=1 // pred_region
      %179 = dma.done [#allocation6], 128
    $region93: #{tpu_custom_call.1} parent=1 // pred_fallthru
      _
    // Predicated region
    $region94: #{tpu_custom_call.1} parent=1 // pred_check
      _
    $region95: #{tpu_custom_call.1} parent=1 // pred_check_branch
      %181 = sbr.rel (0) target = $region97
    $region96: #{tpu_custom_call.1} parent=1 // pred_region
      %182 = dma.done [#allocation6], 2048
    $region97: #{tpu_custom_call.1} parent=1 // pred_fallthru
      _
    // Predicated region
    $region98: #{tpu_custom_call.1} parent=1 // pred_check
      _
    $region99: #{tpu_custom_call.1} parent=1 // pred_check_branch
      %184 = sbr.rel (0) target = $region101
    $region100: #{tpu_custom_call.1} parent=1 // pred_region
      %185 = dma.done [#allocation9], 2048
    $region101: #{tpu_custom_call.1} parent=1 // pred_fallthru
      _
    // Predicated region
    $region102: #{tpu_custom_call.1} parent=1 // pred_check
      _
    $region103: #{tpu_custom_call.1} parent=1 // pred_check_branch
      %187 = sbr.rel (0) target = $region105
    $region104: #{tpu_custom_call.1} parent=1 // pred_region
      %188 = dma.done [#allocation9], 2048
    $region105: #{tpu_custom_call.1} parent=1 // pred_fallthru
      _
    // Predicated region
    $region106: #{tpu_custom_call.1} parent=1 // pred_check
      _
    $region107: #{tpu_custom_call.1} parent=1 // pred_check_branch
      %190 = sbr.rel (0) target = $region109
    $region108: #{tpu_custom_call.1} parent=1 // pred_region
      %191 = dma.done [#allocation12], 2048
    $region109: #{tpu_custom_call.1} parent=1 // pred_fallthru
      _
    // Predicated region
    $region110: #{tpu_custom_call.1} parent=1 // pred_check
      _
    $region111: #{tpu_custom_call.1} parent=1 // pred_check_branch
      %193 = sbr.rel (0) target = $region113
    $region112: #{tpu_custom_call.1} parent=1 // pred_region
      %194 = dma.done [#allocation12], 2048
    $region113: #{tpu_custom_call.1} parent=1 // pred_fallthru
      _
    // Predicated region
    $region114: #{tpu_custom_call.1} parent=1 // pred_check
      _
    $region115: #{tpu_custom_call.1} parent=1 // pred_check_branch
      %196 = sbr.rel (0) target = $region117
    $region116: #{tpu_custom_call.1} parent=1 // pred_region
      %197 = dma.done [#allocation15], 2048
    $region117: #{tpu_custom_call.1} parent=1 // pred_fallthru
      _
    // Predicated region
    $region118: #{tpu_custom_call.1} parent=1 // pred_check
      _
    $region119: #{tpu_custom_call.1} parent=1 // pred_check_branch
      %199 = sbr.rel (0) target = $region121
    $region120: #{tpu_custom_call.1} parent=1 // pred_region
      %200 = dma.done [#allocation15], 2048
    $region121: #{tpu_custom_call.1} parent=1 // pred_fallthru
      _
    // Predicated region
    $region122: #{tpu_custom_call.1} parent=1 // pred_check
      _
    $region123: #{tpu_custom_call.1} parent=1 // pred_check_branch
      %202 = sbr.rel (0) target = $region125
    $region124: #{tpu_custom_call.1} parent=1 // pred_region
      %203 = dma.done [#allocation18], 2048
    $region125: #{tpu_custom_call.1} parent=1 // pred_fallthru
      _
    %v204 = vld [vmem:[#allocation2] sm:$0xff]
    %v205 = vld [vmem:[#allocation5] sm:$0xff]
    %v206 = vld [vmem:[#allocation7] sm:$0xff]
    %v207 = vld [vmem:[#allocation7 + $0x8] sm:$0xff]
    %v208 = vld [vmem:[#allocation7 + $0x10] sm:$0xff]
    %v209 = vld [vmem:[#allocation7 + $0x18] sm:$0xff]
    %v210 = vld [vmem:[#allocation7 + $0x20] sm:$0xff]
    %v211 = vld [vmem:[#allocation7 + $0x28] sm:$0xff]
    %v212 = vld [vmem:[#allocation7 + $0x30] sm:$0xff]
    %v213 = vld [vmem:[#allocation7 + $0x38] sm:$0xff]
    %v214 = vld [vmem:[#allocation7 + $0x40] sm:$0xff]
    %v215 = vld [vmem:[#allocation7 + $0x48] sm:$0xff]
    %v216 = vld [vmem:[#allocation7 + $0x50] sm:$0xff]
    %v217 = vld [vmem:[#allocation7 + $0x58] sm:$0xff]
    %v218 = vld [vmem:[#allocation7 + $0x60] sm:$0xff]
    %v219 = vld [vmem:[#allocation7 + $0x68] sm:$0xff]
    %v220 = vld [vmem:[#allocation7 + $0x70] sm:$0xff]
    %v221 = vld [vmem:[#allocation7 + $0x78] sm:$0xff]
    %v222 = vld [vmem:[#allocation8] sm:$0xff]
    %v223 = vld [vmem:[#allocation8 + $0x8] sm:$0xff]
    %v224 = vld [vmem:[#allocation8 + $0x10] sm:$0xff]
    %v225 = vld [vmem:[#allocation8 + $0x18] sm:$0xff]
    %v226 = vld [vmem:[#allocation8 + $0x20] sm:$0xff]
    %v227 = vld [vmem:[#allocation8 + $0x28] sm:$0xff]
    %v228 = vld [vmem:[#allocation8 + $0x30] sm:$0xff]
    %v229 = vld [vmem:[#allocation8 + $0x38] sm:$0xff]
    %v230 = vld [vmem:[#allocation8 + $0x40] sm:$0xff]
    %v231 = vld [vmem:[#allocation8 + $0x48] sm:$0xff]
    %v232 = vld [vmem:[#allocation8 + $0x50] sm:$0xff]
    %v233 = vld [vmem:[#allocation8 + $0x58] sm:$0xff]
    %v234 = vld [vmem:[#allocation8 + $0x60] sm:$0xff]
    %v235 = vld [vmem:[#allocation8 + $0x68] sm:$0xff]
    %v236 = vld [vmem:[#allocation8 + $0x70] sm:$0xff]
    %v237 = vld [vmem:[#allocation8 + $0x78] sm:$0xff]
    %238 = vmatprep.subr.mxu0 0.0
    %239 = vmatpush1.msra.mxu0 %v222
    %240 = vmatprep.subr.mxu0 0.0
    %241 = vmatpush1.msra.mxu0 %v223
    %242 = vmatprep.subr.mxu0 0.0
    %243 = vmatpush1.msra.mxu0 %v224
    %244 = vmatprep.subr.mxu0 0.0
    %245 = vmatpush1.msra.mxu0 %v225
    %246 = vmatprep.subr.mxu0 0.0
    %247 = vmatpush1.msra.mxu0 %v226
    %248 = vmatprep.subr.mxu0 0.0
    %249 = vmatpush1.msra.mxu0 %v227
    %250 = vmatprep.subr.mxu0 0.0
    %251 = vmatpush1.msra.mxu0 %v228
    %252 = vmatprep.subr.mxu0 0.0
    %253 = vmatpush1.msra.mxu0 %v229
    %254 = vmatprep.subr.mxu0 0.0
    %255 = vmatpush1.msra.mxu0 %v230
    %256 = vmatprep.subr.mxu0 0.0
    %257 = vmatpush1.msra.mxu0 %v231
    %258 = vmatprep.subr.mxu0 0.0
    %259 = vmatpush1.msra.mxu0 %v232
    %260 = vmatprep.subr.mxu0 0.0
    %261 = vmatpush1.msra.mxu0 %v233
    %262 = vmatprep.subr.mxu0 0.0
    %263 = vmatpush1.msra.mxu0 %v234
    %264 = vmatprep.subr.mxu0 0.0
    %265 = vmatpush1.msra.mxu0 %v235
    %266 = vmatprep.subr.mxu0 0.0
    %267 = vmatpush1.msra.mxu0 %v236
    %268 = vmatprep.subr.mxu0 0.0
    %269 = vmatpush1.msra.mxu0 %v237
    %270 = vmatprep.subr.mxu0 0.0
    %271 = vmatpush1.msra.mxu0 0.0
    %272 = vmatprep.subr.mxu0 0.0
    %273 = vmatpush1.msra.mxu0 0.0
    %274 = vmatprep.subr.mxu0 0.0
    %275 = vmatpush1.msra.mxu0 0.0
    %276 = vmatprep.subr.mxu0 0.0
    %277 = vmatpush1.msra.mxu0 0.0
    %278 = vmatprep.subr.mxu0 0.0
    %279 = vmatpush1.msra.mxu0 0.0
    %280 = vmatprep.subr.mxu0 0.0
    %281 = vmatpush1.msra.mxu0 0.0
    %282 = vmatprep.subr.mxu0 0.0
    %283 = vmatpush1.msra.mxu0 0.0
    %284 = vmatprep.subr.mxu0 0.0
    %285 = vmatpush1.msra.mxu0 0.0
    %286 = vmatprep.subr.mxu0 0.0
    %287 = vmatpush1.msra.mxu0 0.0
    %288 = vmatprep.subr.mxu0 0.0
    %289 = vmatpush1.msra.mxu0 0.0
    %290 = vmatprep.subr.mxu0 0.0
    %291 = vmatpush1.msra.mxu0 0.0
    %292 = vmatprep.subr.mxu0 0.0
    %293 = vmatpush1.msra.mxu0 0.0
    %294 = vmatprep.subr.mxu0 0.0
    %295 = vmatpush1.msra.mxu0 0.0
    %296 = vmatprep.subr.mxu0 0.0
    %297 = vmatpush1.msra.mxu0 0.0
    %298 = vmatprep.subr.mxu0 0.0
    %299 = vmatpush1.msra.mxu0 0.0
    %300 = vmatprep.subr.mxu0 0.0
    %301 = vmatpush1.msra.mxu0 0.0
    %302 = vmatprep.mubr.f32.mxu0 0.0
    %303 = vmatmul.mubr.f32.gmra.mrb[0].mxu0 %v205
    %v304 = vpop.f32.mrb[0].mxu0
    %v305 = vadd.f32 0.0, %v304
    %v306 = vpop.f32.mrb[0].mxu0
    %307 = vdwg.mxu0
    %308 = vmatprep.subr.mxu0 0.0
    %309 = vmatpush1.msra.mxu0 %v206
    %310 = vmatprep.subr.mxu0 0.0
    %311 = vmatpush1.msra.mxu0 %v207
    %312 = vmatprep.subr.mxu0 0.0
    %313 = vmatpush1.msra.mxu0 %v208
    %314 = vmatprep.subr.mxu0 0.0
    %315 = vmatpush1.msra.mxu0 %v209
    %316 = vmatprep.subr.mxu0 0.0
    %317 = vmatpush1.msra.mxu0 %v210
    %318 = vmatprep.subr.mxu0 0.0
    %319 = vmatpush1.msra.mxu0 %v211
    %320 = vmatprep.subr.mxu0 0.0
    %321 = vmatpush1.msra.mxu0 %v212
    %322 = vmatprep.subr.mxu0 0.0
    %323 = vmatpush1.msra.mxu0 %v213
    %324 = vmatprep.subr.mxu0 0.0
    %325 = vmatpush1.msra.mxu0 %v214
    %326 = vmatprep.subr.mxu0 0.0
    %327 = vmatpush1.msra.mxu0 %v215
    %328 = vmatprep.subr.mxu0 0.0
    %329 = vmatpush1.msra.mxu0 %v216
    %330 = vmatprep.subr.mxu0 0.0
    %331 = vmatpush1.msra.mxu0 %v217
    %332 = vmatprep.subr.mxu0 0.0
    %333 = vmatpush1.msra.mxu0 %v218
    %334 = vmatprep.subr.mxu0 0.0
    %335 = vmatpush1.msra.mxu0 %v219
    %336 = vmatprep.subr.mxu0 0.0
    %337 = vmatpush1.msra.mxu0 %v220
    %338 = vmatprep.subr.mxu0 0.0
    %339 = vmatpush1.msra.mxu0 %v221
    %340 = vmatprep.subr.mxu0 0.0
    %341 = vmatpush1.msra.mxu0 0.0
    %342 = vmatprep.subr.mxu0 0.0
    %343 = vmatpush1.msra.mxu0 0.0
    %344 = vmatprep.subr.mxu0 0.0
    %345 = vmatpush1.msra.mxu0 0.0
    %346 = vmatprep.subr.mxu0 0.0
    %347 = vmatpush1.msra.mxu0 0.0
    %348 = vmatprep.subr.mxu0 0.0
    %349 = vmatpush1.msra.mxu0 0.0
    %350 = vmatprep.subr.mxu0 0.0
    %351 = vmatpush1.msra.mxu0 0.0
    %352 = vmatprep.subr.mxu0 0.0
    %353 = vmatpush1.msra.mxu0 0.0
    %354 = vmatprep.subr.mxu0 0.0
    %355 = vmatpush1.msra.mxu0 0.0
    %356 = vmatprep.subr.mxu0 0.0
    %357 = vmatpush1.msra.mxu0 0.0
    %358 = vmatprep.subr.mxu0 0.0
    %359 = vmatpush1.msra.mxu0 0.0
    %360 = vmatprep.subr.mxu0 0.0
    %361 = vmatpush1.msra.mxu0 0.0
    %362 = vmatprep.subr.mxu0 0.0
    %363 = vmatpush1.msra.mxu0 0.0
    %364 = vmatprep.subr.mxu0 0.0
    %365 = vmatpush1.msra.mxu0 0.0
    %366 = vmatprep.subr.mxu0 0.0
    %367 = vmatpush1.msra.mxu0 0.0
    %368 = vmatprep.subr.mxu0 0.0
    %369 = vmatpush1.msra.mxu0 0.0
    %370 = vmatprep.subr.mxu0 0.0
    %371 = vmatpush1.msra.mxu0 0.0
    %372 = vmatprep.mubr.f32.mxu0 0.0
    %373 = vmatmul.mubr.f32.gmra.mrb[0].mxu0 %v204
    %v374 = vpop.f32.mrb[0].mxu0
    %v375 = vadd.f32 %v305, %v374
    %v376 = vpop.f32.mrb[0].mxu0
    %377 = vdwg.mxu0
    %v378 = vld [vmem:[%s4] sm:$0x1]
    %v380 = vlaneseq
    %v381 = vshrl.u32 %v380, 7
    %v382 = vsub.s32 0, %v381
    %v383 = vrot.slane %v378, %v382
    %v385 = vadd.f32 %v375, %v383
    %vm386 = vcmp.gt.f32.partialorder %v385, 0.0
    %v387 = vmin.f32 %v385, 0.0
    %v388 = vmul.f32 %v387, 1.442695
    %v389 = vpow.pop %v388
    %v390 = vsub.f32 %v389, 1.0
    %v391 = vmul.f32 %v390, 1.6732632
    %v392 = vsel %vm386, %v385, %v391
    %v393 = vmul.f32 %v392, 1.050701
    %v394 = vld [vmem:[#allocation10] sm:$0xff]
    %v395 = vld [vmem:[#allocation10 + $0x8] sm:$0xff]
    %v396 = vld [vmem:[#allocation10 + $0x10] sm:$0xff]
    %v397 = vld [vmem:[#allocation10 + $0x18] sm:$0xff]
    %v398 = vld [vmem:[#allocation10 + $0x20] sm:$0xff]
    %v399 = vld [vmem:[#allocation10 + $0x28] sm:$0xff]
    %v400 = vld [vmem:[#allocation10 + $0x30] sm:$0xff]
    %v401 = vld [vmem:[#allocation10 + $0x38] sm:$0xff]
    %v402 = vld [vmem:[#allocation10 + $0x40] sm:$0xff]
    %v403 = vld [vmem:[#allocation10 + $0x48] sm:$0xff]
    %v404 = vld [vmem:[#allocation10 + $0x50] sm:$0xff]
    %v405 = vld [vmem:[#allocation10 + $0x58] sm:$0xff]
    %v406 = vld [vmem:[#allocation10 + $0x60] sm:$0xff]
    %v407 = vld [vmem:[#allocation10 + $0x68] sm:$0xff]
    %v408 = vld [vmem:[#allocation10 + $0x70] sm:$0xff]
    %v409 = vld [vmem:[#allocation10 + $0x78] sm:$0xff]
    %v410 = vld [vmem:[%s6] sm:$0x1]
    %v412 = vlaneseq
    %v413 = vshrl.u32 %v412, 7
    %v414 = vsub.s32 0, %v413
    %v415 = vrot.slane %v410, %v414
    %417 = vmatprep.subr.mxu0 0.0
    %418 = vmatpush1.msra.mxu0 %v394
    %419 = vmatprep.subr.mxu0 0.0
    %420 = vmatpush1.msra.mxu0 %v395
    %421 = vmatprep.subr.mxu0 0.0
    %422 = vmatpush1.msra.mxu0 %v396
    %423 = vmatprep.subr.mxu0 0.0
    %424 = vmatpush1.msra.mxu0 %v397
    %425 = vmatprep.subr.mxu0 0.0
    %426 = vmatpush1.msra.mxu0 %v398
    %427 = vmatprep.subr.mxu0 0.0
    %428 = vmatpush1.msra.mxu0 %v399
    %429 = vmatprep.subr.mxu0 0.0
    %430 = vmatpush1.msra.mxu0 %v400
    %431 = vmatprep.subr.mxu0 0.0
    %432 = vmatpush1.msra.mxu0 %v401
    %433 = vmatprep.subr.mxu0 0.0
    %434 = vmatpush1.msra.mxu0 %v402
    %435 = vmatprep.subr.mxu0 0.0
    %436 = vmatpush1.msra.mxu0 %v403
    %437 = vmatprep.subr.mxu0 0.0
    %438 = vmatpush1.msra.mxu0 %v404
    %439 = vmatprep.subr.mxu0 0.0
    %440 = vmatpush1.msra.mxu0 %v405
    %441 = vmatprep.subr.mxu0 0.0
    %442 = vmatpush1.msra.mxu0 %v406
    %443 = vmatprep.subr.mxu0 0.0
    %444 = vmatpush1.msra.mxu0 %v407
    %445 = vmatprep.subr.mxu0 0.0
    %446 = vmatpush1.msra.mxu0 %v408
    %447 = vmatprep.subr.mxu0 0.0
    %448 = vmatpush1.msra.mxu0 %v409
    %449 = vmatprep.subr.mxu0 0.0
    %450 = vmatpush1.msra.mxu0 0.0
    %451 = vmatprep.subr.mxu0 0.0
    %452 = vmatpush1.msra.mxu0 0.0
    %453 = vmatprep.subr.mxu0 0.0
    %454 = vmatpush1.msra.mxu0 0.0
    %455 = vmatprep.subr.mxu0 0.0
    %456 = vmatpush1.msra.mxu0 0.0
    %457 = vmatprep.subr.mxu0 0.0
    %458 = vmatpush1.msra.mxu0 0.0
    %459 = vmatprep.subr.mxu0 0.0
    %460 = vmatpush1.msra.mxu0 0.0
    %461 = vmatprep.subr.mxu0 0.0
    %462 = vmatpush1.msra.mxu0 0.0
    %463 = vmatprep.subr.mxu0 0.0
    %464 = vmatpush1.msra.mxu0 0.0
    %465 = vmatprep.subr.mxu0 0.0
    %466 = vmatpush1.msra.mxu0 0.0
    %467 = vmatprep.subr.mxu0 0.0
    %468 = vmatpush1.msra.mxu0 0.0
    %469 = vmatprep.subr.mxu0 0.0
    %470 = vmatpush1.msra.mxu0 0.0
    %471 = vmatprep.subr.mxu0 0.0
    %472 = vmatpush1.msra.mxu0 0.0
    %473 = vmatprep.subr.mxu0 0.0
    %474 = vmatpush1.msra.mxu0 0.0
    %475 = vmatprep.subr.mxu0 0.0
    %476 = vmatpush1.msra.mxu0 0.0
    %477 = vmatprep.subr.mxu0 0.0
    %478 = vmatpush1.msra.mxu0 0.0
    %479 = vmatprep.subr.mxu0 0.0
    %480 = vmatpush1.msra.mxu0 0.0
    %481 = vmatprep.mubr.f32.mxu0 0.0
    %482 = vmatmul.mubr.f32.gmra.mrb[0].mxu0 %v393
    %v483 = vpop.f32.mrb[0].mxu0
    %v484 = vadd.f32 %v415, %v483
    %v485 = vpop.f32.mrb[0].mxu0
    %486 = vdwg.mxu0
    %v487 = vld [vmem:[#allocation11] sm:$0xff]
    %v488 = vld [vmem:[#allocation11 + $0x8] sm:$0xff]
    %v489 = vld [vmem:[#allocation11 + $0x10] sm:$0xff]
    %v490 = vld [vmem:[#allocation11 + $0x18] sm:$0xff]
    %v491 = vld [vmem:[#allocation11 + $0x20] sm:$0xff]
    %v492 = vld [vmem:[#allocation11 + $0x28] sm:$0xff]
    %v493 = vld [vmem:[#allocation11 + $0x30] sm:$0xff]
    %v494 = vld [vmem:[#allocation11 + $0x38] sm:$0xff]
    %v495 = vld [vmem:[#allocation11 + $0x40] sm:$0xff]
    %v496 = vld [vmem:[#allocation11 + $0x48] sm:$0xff]
    %v497 = vld [vmem:[#allocation11 + $0x50] sm:$0xff]
    %v498 = vld [vmem:[#allocation11 + $0x58] sm:$0xff]
    %v499 = vld [vmem:[#allocation11 + $0x60] sm:$0xff]
    %v500 = vld [vmem:[#allocation11 + $0x68] sm:$0xff]
    %v501 = vld [vmem:[#allocation11 + $0x70] sm:$0xff]
    %v502 = vld [vmem:[#allocation11 + $0x78] sm:$0xff]
    %v503 = vld [vmem:[%s8] sm:$0x1]
    %v505 = vlaneseq
    %v506 = vshrl.u32 %v505, 7
    %v507 = vsub.s32 0, %v506
    %v508 = vrot.slane %v503, %v507
    %510 = vmatprep.subr.mxu0 0.0
    %511 = vmatpush1.msra.mxu0 %v487
    %512 = vmatprep.subr.mxu0 0.0
    %513 = vmatpush1.msra.mxu0 %v488
    %514 = vmatprep.subr.mxu0 0.0
    %515 = vmatpush1.msra.mxu0 %v489
    %516 = vmatprep.subr.mxu0 0.0
    %517 = vmatpush1.msra.mxu0 %v490
    %518 = vmatprep.subr.mxu0 0.0
    %519 = vmatpush1.msra.mxu0 %v491
    %520 = vmatprep.subr.mxu0 0.0
    %521 = vmatpush1.msra.mxu0 %v492
    %522 = vmatprep.subr.mxu0 0.0
    %523 = vmatpush1.msra.mxu0 %v493
    %524 = vmatprep.subr.mxu0 0.0
    %525 = vmatpush1.msra.mxu0 %v494
    %526 = vmatprep.subr.mxu0 0.0
    %527 = vmatpush1.msra.mxu0 %v495
    %528 = vmatprep.subr.mxu0 0.0
    %529 = vmatpush1.msra.mxu0 %v496
    %530 = vmatprep.subr.mxu0 0.0
    %531 = vmatpush1.msra.mxu0 %v497
    %532 = vmatprep.subr.mxu0 0.0
    %533 = vmatpush1.msra.mxu0 %v498
    %534 = vmatprep.subr.mxu0 0.0
    %535 = vmatpush1.msra.mxu0 %v499
    %536 = vmatprep.subr.mxu0 0.0
    %537 = vmatpush1.msra.mxu0 %v500
    %538 = vmatprep.subr.mxu0 0.0
    %539 = vmatpush1.msra.mxu0 %v501
    %540 = vmatprep.subr.mxu0 0.0
    %541 = vmatpush1.msra.mxu0 %v502
    %542 = vmatprep.subr.mxu0 0.0
    %543 = vmatpush1.msra.mxu0 0.0
    %544 = vmatprep.subr.mxu0 0.0
    %545 = vmatpush1.msra.mxu0 0.0
    %546 = vmatprep.subr.mxu0 0.0
    %547 = vmatpush1.msra.mxu0 0.0
    %548 = vmatprep.subr.mxu0 0.0
    %549 = vmatpush1.msra.mxu0 0.0
    %550 = vmatprep.subr.mxu0 0.0
    %551 = vmatpush1.msra.mxu0 0.0
    %552 = vmatprep.subr.mxu0 0.0
    %553 = vmatpush1.msra.mxu0 0.0
    %554 = vmatprep.subr.mxu0 0.0
    %555 = vmatpush1.msra.mxu0 0.0
    %556 = vmatprep.subr.mxu0 0.0
    %557 = vmatpush1.msra.mxu0 0.0
    %558 = vmatprep.subr.mxu0 0.0
    %559 = vmatpush1.msra.mxu0 0.0
    %560 = vmatprep.subr.mxu0 0.0
    %561 = vmatpush1.msra.mxu0 0.0
    %562 = vmatprep.subr.mxu0 0.0
    %563 = vmatpush1.msra.mxu0 0.0
    %564 = vmatprep.subr.mxu0 0.0
    %565 = vmatpush1.msra.mxu0 0.0
    %566 = vmatprep.subr.mxu0 0.0
    %567 = vmatpush1.msra.mxu0 0.0
    %568 = vmatprep.subr.mxu0 0.0
    %569 = vmatpush1.msra.mxu0 0.0
    %570 = vmatprep.subr.mxu0 0.0
    %571 = vmatpush1.msra.mxu0 0.0
    %572 = vmatprep.subr.mxu0 0.0
    %573 = vmatpush1.msra.mxu0 0.0
    %574 = vmatprep.mubr.f32.mxu0 0.0
    %575 = vmatmul.mubr.f32.gmra.mrb[0].mxu0 %v484
    %v576 = vpop.f32.mrb[0].mxu0
    %v577 = vadd.f32 %v508, %v576
    %v578 = vpop.f32.mrb[0].mxu0
    %579 = vdwg.mxu0
    %vm580 = vcmp.gt.f32.partialorder %v577, 0.0
    %v581 = vmin.f32 %v577, 0.0
    %v582 = vmul.f32 %v581, 1.442695
    %v583 = vpow.pop %v582
    %v584 = vsub.f32 %v583, 1.0
    %v585 = vmul.f32 %v584, 1.6732632
    %v586 = vsel %vm580, %v577, %v585
    %v587 = vmul.f32 %v586, 1.050701
    %v588 = vld [vmem:[#allocation13] sm:$0xff]
    %v589 = vld [vmem:[#allocation13 + $0x8] sm:$0xff]
    %v590 = vld [vmem:[#allocation13 + $0x10] sm:$0xff]
    %v591 = vld [vmem:[#allocation13 + $0x18] sm:$0xff]
    %v592 = vld [vmem:[#allocation13 + $0x20] sm:$0xff]
    %v593 = vld [vmem:[#allocation13 + $0x28] sm:$0xff]
    %v594 = vld [vmem:[#allocation13 + $0x30] sm:$0xff]
    %v595 = vld [vmem:[#allocation13 + $0x38] sm:$0xff]
    %v596 = vld [vmem:[#allocation13 + $0x40] sm:$0xff]
    %v597 = vld [vmem:[#allocation13 + $0x48] sm:$0xff]
    %v598 = vld [vmem:[#allocation13 + $0x50] sm:$0xff]
    %v599 = vld [vmem:[#allocation13 + $0x58] sm:$0xff]
    %v600 = vld [vmem:[#allocation13 + $0x60] sm:$0xff]
    %v601 = vld [vmem:[#allocation13 + $0x68] sm:$0xff]
    %v602 = vld [vmem:[#allocation13 + $0x70] sm:$0xff]
    %v603 = vld [vmem:[#allocation13 + $0x78] sm:$0xff]
    %v604 = vld [vmem:[%s10] sm:$0x1]
    %v606 = vlaneseq
    %v607 = vshrl.u32 %v606, 7
    %v608 = vsub.s32 0, %v607
    %v609 = vrot.slane %v604, %v608
    %611 = vmatprep.subr.mxu0 0.0
    %612 = vmatpush1.msra.mxu0 %v588
    %613 = vmatprep.subr.mxu0 0.0
    %614 = vmatpush1.msra.mxu0 %v589
    %615 = vmatprep.subr.mxu0 0.0
    %616 = vmatpush1.msra.mxu0 %v590
    %617 = vmatprep.subr.mxu0 0.0
    %618 = vmatpush1.msra.mxu0 %v591
    %619 = vmatprep.subr.mxu0 0.0
    %620 = vmatpush1.msra.mxu0 %v592
    %621 = vmatprep.subr.mxu0 0.0
    %622 = vmatpush1.msra.mxu0 %v593
    %623 = vmatprep.subr.mxu0 0.0
    %624 = vmatpush1.msra.mxu0 %v594
    %625 = vmatprep.subr.mxu0 0.0
    %626 = vmatpush1.msra.mxu0 %v595
    %627 = vmatprep.subr.mxu0 0.0
    %628 = vmatpush1.msra.mxu0 %v596
    %629 = vmatprep.subr.mxu0 0.0
    %630 = vmatpush1.msra.mxu0 %v597
    %631 = vmatprep.subr.mxu0 0.0
    %632 = vmatpush1.msra.mxu0 %v598
    %633 = vmatprep.subr.mxu0 0.0
    %634 = vmatpush1.msra.mxu0 %v599
    %635 = vmatprep.subr.mxu0 0.0
    %636 = vmatpush1.msra.mxu0 %v600
    %637 = vmatprep.subr.mxu0 0.0
    %638 = vmatpush1.msra.mxu0 %v601
    %639 = vmatprep.subr.mxu0 0.0
    %640 = vmatpush1.msra.mxu0 %v602
    %641 = vmatprep.subr.mxu0 0.0
    %642 = vmatpush1.msra.mxu0 %v603
    %643 = vmatprep.subr.mxu0 0.0
    %644 = vmatpush1.msra.mxu0 0.0
    %645 = vmatprep.subr.mxu0 0.0
    %646 = vmatpush1.msra.mxu0 0.0
    %647 = vmatprep.subr.mxu0 0.0
    %648 = vmatpush1.msra.mxu0 0.0
    %649 = vmatprep.subr.mxu0 0.0
    %650 = vmatpush1.msra.mxu0 0.0
    %651 = vmatprep.subr.mxu0 0.0
    %652 = vmatpush1.msra.mxu0 0.0
    %653 = vmatprep.subr.mxu0 0.0
    %654 = vmatpush1.msra.mxu0 0.0
    %655 = vmatprep.subr.mxu0 0.0
    %656 = vmatpush1.msra.mxu0 0.0
    %657 = vmatprep.subr.mxu0 0.0
    %658 = vmatpush1.msra.mxu0 0.0
    %659 = vmatprep.subr.mxu0 0.0
    %660 = vmatpush1.msra.mxu0 0.0
    %661 = vmatprep.subr.mxu0 0.0
    %662 = vmatpush1.msra.mxu0 0.0
    %663 = vmatprep.subr.mxu0 0.0
    %664 = vmatpush1.msra.mxu0 0.0
    %665 = vmatprep.subr.mxu0 0.0
    %666 = vmatpush1.msra.mxu0 0.0
    %667 = vmatprep.subr.mxu0 0.0
    %668 = vmatpush1.msra.mxu0 0.0
    %669 = vmatprep.subr.mxu0 0.0
    %670 = vmatpush1.msra.mxu0 0.0
    %671 = vmatprep.subr.mxu0 0.0
    %672 = vmatpush1.msra.mxu0 0.0
    %673 = vmatprep.subr.mxu0 0.0
    %674 = vmatpush1.msra.mxu0 0.0
    %675 = vmatprep.mubr.f32.mxu0 0.0
    %676 = vmatmul.mubr.f32.gmra.mrb[0].mxu0 %v587
    %v677 = vpop.f32.mrb[0].mxu0
    %v678 = vadd.f32 %v609, %v677
    %v679 = vpop.f32.mrb[0].mxu0
    %680 = vdwg.mxu0
    %681 = vst [vmem:[#allocation20] sm:$0xff] %v678
    %v682 = vld [vmem:[#allocation14] sm:$0xff]
    %v683 = vld [vmem:[#allocation14 + $0x8] sm:$0xff]
    %v684 = vld [vmem:[#allocation14 + $0x10] sm:$0xff]
    %v685 = vld [vmem:[#allocation14 + $0x18] sm:$0xff]
    %v686 = vld [vmem:[#allocation14 + $0x20] sm:$0xff]
    %v687 = vld [vmem:[#allocation14 + $0x28] sm:$0xff]
    %v688 = vld [vmem:[#allocation14 + $0x30] sm:$0xff]
    %v689 = vld [vmem:[#allocation14 + $0x38] sm:$0xff]
    %v690 = vld [vmem:[#allocation14 + $0x40] sm:$0xff]
    %v691 = vld [vmem:[#allocation14 + $0x48] sm:$0xff]
    %v692 = vld [vmem:[#allocation14 + $0x50] sm:$0xff]
    %v693 = vld [vmem:[#allocation14 + $0x58] sm:$0xff]
    %v694 = vld [vmem:[#allocation14 + $0x60] sm:$0xff]
    %v695 = vld [vmem:[#allocation14 + $0x68] sm:$0xff]
    %v696 = vld [vmem:[#allocation14 + $0x70] sm:$0xff]
    %v697 = vld [vmem:[#allocation14 + $0x78] sm:$0xff]
    %v698 = vld [vmem:[%s12] sm:$0x1]
    %v700 = vlaneseq
    %v701 = vshrl.u32 %v700, 7
    %v702 = vsub.s32 0, %v701
    %v703 = vrot.slane %v698, %v702
    %705 = vmatprep.subr.mxu0 0.0
    %706 = vmatpush1.msra.mxu0 %v682
    %707 = vmatprep.subr.mxu0 0.0
    %708 = vmatpush1.msra.mxu0 %v683
    %709 = vmatprep.subr.mxu0 0.0
    %710 = vmatpush1.msra.mxu0 %v684
    %711 = vmatprep.subr.mxu0 0.0
    %712 = vmatpush1.msra.mxu0 %v685
    %713 = vmatprep.subr.mxu0 0.0
    %714 = vmatpush1.msra.mxu0 %v686
    %715 = vmatprep.subr.mxu0 0.0
    %716 = vmatpush1.msra.mxu0 %v687
    %717 = vmatprep.subr.mxu0 0.0
    %718 = vmatpush1.msra.mxu0 %v688
    %719 = vmatprep.subr.mxu0 0.0
    %720 = vmatpush1.msra.mxu0 %v689
    %721 = vmatprep.subr.mxu0 0.0
    %722 = vmatpush1.msra.mxu0 %v690
    %723 = vmatprep.subr.mxu0 0.0
    %724 = vmatpush1.msra.mxu0 %v691
    %725 = vmatprep.subr.mxu0 0.0
    %726 = vmatpush1.msra.mxu0 %v692
    %727 = vmatprep.subr.mxu0 0.0
    %728 = vmatpush1.msra.mxu0 %v693
    %729 = vmatprep.subr.mxu0 0.0
    %730 = vmatpush1.msra.mxu0 %v694
    %731 = vmatprep.subr.mxu0 0.0
    %732 = vmatpush1.msra.mxu0 %v695
    %733 = vmatprep.subr.mxu0 0.0
    %734 = vmatpush1.msra.mxu0 %v696
    %735 = vmatprep.subr.mxu0 0.0
    %736 = vmatpush1.msra.mxu0 %v697
    %737 = vmatprep.subr.mxu0 0.0
    %738 = vmatpush1.msra.mxu0 0.0
    %739 = vmatprep.subr.mxu0 0.0
    %740 = vmatpush1.msra.mxu0 0.0
    %741 = vmatprep.subr.mxu0 0.0
    %742 = vmatpush1.msra.mxu0 0.0
    %743 = vmatprep.subr.mxu0 0.0
    %744 = vmatpush1.msra.mxu0 0.0
    %745 = vmatprep.subr.mxu0 0.0
    %746 = vmatpush1.msra.mxu0 0.0
    %747 = vmatprep.subr.mxu0 0.0
    %748 = vmatpush1.msra.mxu0 0.0
    %749 = vmatprep.subr.mxu0 0.0
    %750 = vmatpush1.msra.mxu0 0.0
    %751 = vmatprep.subr.mxu0 0.0
    %752 = vmatpush1.msra.mxu0 0.0
    %753 = vmatprep.subr.mxu0 0.0
    %754 = vmatpush1.msra.mxu0 0.0
    %755 = vmatprep.subr.mxu0 0.0
    %756 = vmatpush1.msra.mxu0 0.0
    %757 = vmatprep.subr.mxu0 0.0
    %758 = vmatpush1.msra.mxu0 0.0
    %759 = vmatprep.subr.mxu0 0.0
    %760 = vmatpush1.msra.mxu0 0.0
    %761 = vmatprep.subr.mxu0 0.0
    %762 = vmatpush1.msra.mxu0 0.0
    %763 = vmatprep.subr.mxu0 0.0
    %764 = vmatpush1.msra.mxu0 0.0
    %765 = vmatprep.subr.mxu0 0.0
    %766 = vmatpush1.msra.mxu0 0.0
    %767 = vmatprep.subr.mxu0 0.0
    %768 = vmatpush1.msra.mxu0 0.0
    %769 = vmatprep.mubr.f32.mxu0 0.0
    %770 = vmatmul.mubr.f32.gmra.mrb[0].mxu0 %v484
    %v771 = vpop.f32.mrb[0].mxu0
    %v772 = vadd.f32 %v703, %v771
    %v773 = vpop.f32.mrb[0].mxu0
    %774 = vdwg.mxu0
    %vm775 = vcmp.gt.f32.partialorder %v772, 0.0
    %v776 = vmin.f32 %v772, 0.0
    %v777 = vmul.f32 %v776, 1.442695
    %v778 = vpow.pop %v777
    %v779 = vsub.f32 %v778, 1.0
    %v780 = vmul.f32 %v779, 1.6732632
    %v781 = vsel %vm775, %v772, %v780
    %v782 = vmul.f32 %v781, 1.050701
    %v783 = vld [vmem:[%s13] sm:$0x1]
    %v785 = vlaneseq
    %v786 = vshrl.u32 %v785, 7
    %v787 = vsub.s32 0, %v786
    %v788 = vrot.slane %v783, %v787
    %v790 = vmul.f32 %v782, %v788
    %v791 = vld [vmem:[%s14] sm:$0x1]
    %v793 = vlaneseq
    %v794 = vshrl.u32 %v793, 7
    %v795 = vsub.s32 0, %v794
    %v796 = vrot.slane %v791, %v795
    %v798 = vadd.f32 %v790, %v796
    %v799 = vld [vmem:[#allocation16] sm:$0xff]
    %v800 = vld [vmem:[#allocation16 + $0x8] sm:$0xff]
    %v801 = vld [vmem:[#allocation16 + $0x10] sm:$0xff]
    %v802 = vld [vmem:[#allocation16 + $0x18] sm:$0xff]
    %v803 = vld [vmem:[#allocation16 + $0x20] sm:$0xff]
    %v804 = vld [vmem:[#allocation16 + $0x28] sm:$0xff]
    %v805 = vld [vmem:[#allocation16 + $0x30] sm:$0xff]
    %v806 = vld [vmem:[#allocation16 + $0x38] sm:$0xff]
    %v807 = vld [vmem:[#allocation16 + $0x40] sm:$0xff]
    %v808 = vld [vmem:[#allocation16 + $0x48] sm:$0xff]
    %v809 = vld [vmem:[#allocation16 + $0x50] sm:$0xff]
    %v810 = vld [vmem:[#allocation16 + $0x58] sm:$0xff]
    %v811 = vld [vmem:[#allocation16 + $0x60] sm:$0xff]
    %v812 = vld [vmem:[#allocation16 + $0x68] sm:$0xff]
    %v813 = vld [vmem:[#allocation16 + $0x70] sm:$0xff]
    %v814 = vld [vmem:[#allocation16 + $0x78] sm:$0xff]
    %v815 = vld [vmem:[%s16] sm:$0x1]
    %v817 = vlaneseq
    %v818 = vshrl.u32 %v817, 7
    %v819 = vsub.s32 0, %v818
    %v820 = vrot.slane %v815, %v819
    %822 = vmatprep.subr.mxu0 0.0
    %823 = vmatpush1.msra.mxu0 %v799
    %824 = vmatprep.subr.mxu0 0.0
    %825 = vmatpush1.msra.mxu0 %v800
    %826 = vmatprep.subr.mxu0 0.0
    %827 = vmatpush1.msra.mxu0 %v801
    %828 = vmatprep.subr.mxu0 0.0
    %829 = vmatpush1.msra.mxu0 %v802
    %830 = vmatprep.subr.mxu0 0.0
    %831 = vmatpush1.msra.mxu0 %v803
    %832 = vmatprep.subr.mxu0 0.0
    %833 = vmatpush1.msra.mxu0 %v804
    %834 = vmatprep.subr.mxu0 0.0
    %835 = vmatpush1.msra.mxu0 %v805
    %836 = vmatprep.subr.mxu0 0.0
    %837 = vmatpush1.msra.mxu0 %v806
    %838 = vmatprep.subr.mxu0 0.0
    %839 = vmatpush1.msra.mxu0 %v807
    %840 = vmatprep.subr.mxu0 0.0
    %841 = vmatpush1.msra.mxu0 %v808
    %842 = vmatprep.subr.mxu0 0.0
    %843 = vmatpush1.msra.mxu0 %v809
    %844 = vmatprep.subr.mxu0 0.0
    %845 = vmatpush1.msra.mxu0 %v810
    %846 = vmatprep.subr.mxu0 0.0
    %847 = vmatpush1.msra.mxu0 %v811
    %848 = vmatprep.subr.mxu0 0.0
    %849 = vmatpush1.msra.mxu0 %v812
    %850 = vmatprep.subr.mxu0 0.0
    %851 = vmatpush1.msra.mxu0 %v813
    %852 = vmatprep.subr.mxu0 0.0
    %853 = vmatpush1.msra.mxu0 %v814
    %854 = vmatprep.subr.mxu0 0.0
    %855 = vmatpush1.msra.mxu0 0.0
    %856 = vmatprep.subr.mxu0 0.0
    %857 = vmatpush1.msra.mxu0 0.0
    %858 = vmatprep.subr.mxu0 0.0
    %859 = vmatpush1.msra.mxu0 0.0
    %860 = vmatprep.subr.mxu0 0.0
    %861 = vmatpush1.msra.mxu0 0.0
    %862 = vmatprep.subr.mxu0 0.0
    %863 = vmatpush1.msra.mxu0 0.0
    %864 = vmatprep.subr.mxu0 0.0
    %865 = vmatpush1.msra.mxu0 0.0
    %866 = vmatprep.subr.mxu0 0.0
    %867 = vmatpush1.msra.mxu0 0.0
    %868 = vmatprep.subr.mxu0 0.0
    %869 = vmatpush1.msra.mxu0 0.0
    %870 = vmatprep.subr.mxu0 0.0
    %871 = vmatpush1.msra.mxu0 0.0
    %872 = vmatprep.subr.mxu0 0.0
    %873 = vmatpush1.msra.mxu0 0.0
    %874 = vmatprep.subr.mxu0 0.0
    %875 = vmatpush1.msra.mxu0 0.0
    %876 = vmatprep.subr.mxu0 0.0
    %877 = vmatpush1.msra.mxu0 0.0
    %878 = vmatprep.subr.mxu0 0.0
    %879 = vmatpush1.msra.mxu0 0.0
    %880 = vmatprep.subr.mxu0 0.0
    %881 = vmatpush1.msra.mxu0 0.0
    %882 = vmatprep.subr.mxu0 0.0
    %883 = vmatpush1.msra.mxu0 0.0
    %884 = vmatprep.subr.mxu0 0.0
    %885 = vmatpush1.msra.mxu0 0.0
    %886 = vmatprep.mubr.f32.mxu0 0.0
    %887 = vmatmul.mubr.f32.gmra.mrb[0].mxu0 %v798
    %v888 = vpop.f32.mrb[0].mxu0
    %v889 = vadd.f32 %v820, %v888
    %v890 = vpop.f32.mrb[0].mxu0
    %891 = vdwg.mxu0
    %vm892 = vcmp.gt.f32.partialorder %v889, 0.0
    %v893 = vmin.f32 %v889, 0.0
    %v894 = vmul.f32 %v893, 1.442695
    %v895 = vpow.pop %v894
    %v896 = vsub.f32 %v895, 1.0
    %v897 = vmul.f32 %v896, 1.6732632
    %v898 = vsel %vm892, %v889, %v897
    %v899 = vmul.f32 %v898, 1.050701
    %v900 = vld [vmem:[%s17] sm:$0x1]
    %v902 = vlaneseq
    %v903 = vshrl.u32 %v902, 7
    %v904 = vsub.s32 0, %v903
    %v905 = vrot.slane %v900, %v904
    %v907 = vmul.f32 %v899, %v905
    %v908 = vld [vmem:[%s18] sm:$0x1]
    %v910 = vlaneseq
    %v911 = vshrl.u32 %v910, 7
    %v912 = vsub.s32 0, %v911
    %v913 = vrot.slane %v908, %v912
    %v915 = vadd.f32 %v907, %v913
    %v916 = vld [vmem:[#allocation17] sm:$0xff]
    %v917 = vld [vmem:[#allocation17 + $0x8] sm:$0xff]
    %v918 = vld [vmem:[#allocation17 + $0x10] sm:$0xff]
    %v919 = vld [vmem:[#allocation17 + $0x18] sm:$0xff]
    %v920 = vld [vmem:[#allocation17 + $0x20] sm:$0xff]
    %v921 = vld [vmem:[#allocation17 + $0x28] sm:$0xff]
    %v922 = vld [vmem:[#allocation17 + $0x30] sm:$0xff]
    %v923 = vld [vmem:[#allocation17 + $0x38] sm:$0xff]
    %v924 = vld [vmem:[#allocation17 + $0x40] sm:$0xff]
    %v925 = vld [vmem:[#allocation17 + $0x48] sm:$0xff]
    %v926 = vld [vmem:[#allocation17 + $0x50] sm:$0xff]
    %v927 = vld [vmem:[#allocation17 + $0x58] sm:$0xff]
    %v928 = vld [vmem:[#allocation17 + $0x60] sm:$0xff]
    %v929 = vld [vmem:[#allocation17 + $0x68] sm:$0xff]
    %v930 = vld [vmem:[#allocation17 + $0x70] sm:$0xff]
    %v931 = vld [vmem:[#allocation17 + $0x78] sm:$0xff]
    %v932 = vld [vmem:[%s20] sm:$0x1]
    %v934 = vlaneseq
    %v935 = vshrl.u32 %v934, 7
    %v936 = vsub.s32 0, %v935
    %v937 = vrot.slane %v932, %v936
    %939 = vmatprep.subr.mxu0 0.0
    %940 = vmatpush1.msra.mxu0 %v916
    %941 = vmatprep.subr.mxu0 0.0
    %942 = vmatpush1.msra.mxu0 %v917
    %943 = vmatprep.subr.mxu0 0.0
    %944 = vmatpush1.msra.mxu0 %v918
    %945 = vmatprep.subr.mxu0 0.0
    %946 = vmatpush1.msra.mxu0 %v919
    %947 = vmatprep.subr.mxu0 0.0
    %948 = vmatpush1.msra.mxu0 %v920
    %949 = vmatprep.subr.mxu0 0.0
    %950 = vmatpush1.msra.mxu0 %v921
    %951 = vmatprep.subr.mxu0 0.0
    %952 = vmatpush1.msra.mxu0 %v922
    %953 = vmatprep.subr.mxu0 0.0
    %954 = vmatpush1.msra.mxu0 %v923
    %955 = vmatprep.subr.mxu0 0.0
    %956 = vmatpush1.msra.mxu0 %v924
    %957 = vmatprep.subr.mxu0 0.0
    %958 = vmatpush1.msra.mxu0 %v925
    %959 = vmatprep.subr.mxu0 0.0
    %960 = vmatpush1.msra.mxu0 %v926
    %961 = vmatprep.subr.mxu0 0.0
    %962 = vmatpush1.msra.mxu0 %v927
    %963 = vmatprep.subr.mxu0 0.0
    %964 = vmatpush1.msra.mxu0 %v928
    %965 = vmatprep.subr.mxu0 0.0
    %966 = vmatpush1.msra.mxu0 %v929
    %967 = vmatprep.subr.mxu0 0.0
    %968 = vmatpush1.msra.mxu0 %v930
    %969 = vmatprep.subr.mxu0 0.0
    %970 = vmatpush1.msra.mxu0 %v931
    %971 = vmatprep.subr.mxu0 0.0
    %972 = vmatpush1.msra.mxu0 0.0
    %973 = vmatprep.subr.mxu0 0.0
    %974 = vmatpush1.msra.mxu0 0.0
    %975 = vmatprep.subr.mxu0 0.0
    %976 = vmatpush1.msra.mxu0 0.0
    %977 = vmatprep.subr.mxu0 0.0
    %978 = vmatpush1.msra.mxu0 0.0
    %979 = vmatprep.subr.mxu0 0.0
    %980 = vmatpush1.msra.mxu0 0.0
    %981 = vmatprep.subr.mxu0 0.0
    %982 = vmatpush1.msra.mxu0 0.0
    %983 = vmatprep.subr.mxu0 0.0
    %984 = vmatpush1.msra.mxu0 0.0
    %985 = vmatprep.subr.mxu0 0.0
    %986 = vmatpush1.msra.mxu0 0.0
    %987 = vmatprep.subr.mxu0 0.0
    %988 = vmatpush1.msra.mxu0 0.0
    %989 = vmatprep.subr.mxu0 0.0
    %990 = vmatpush1.msra.mxu0 0.0
    %991 = vmatprep.subr.mxu0 0.0
    %992 = vmatpush1.msra.mxu0 0.0
    %993 = vmatprep.subr.mxu0 0.0
    %994 = vmatpush1.msra.mxu0 0.0
    %995 = vmatprep.subr.mxu0 0.0
    %996 = vmatpush1.msra.mxu0 0.0
    %997 = vmatprep.subr.mxu0 0.0
    %998 = vmatpush1.msra.mxu0 0.0
    %999 = vmatprep.subr.mxu0 0.0
    %1000 = vmatpush1.msra.mxu0 0.0
    %1001 = vmatprep.subr.mxu0 0.0
    %1002 = vmatpush1.msra.mxu0 0.0
    %1003 = vmatprep.mubr.f32.mxu0 0.0
    %1004 = vmatmul.mubr.f32.gmra.mrb[0].mxu0 %v915
    %v1005 = vpop.f32.mrb[0].mxu0
    %v1006 = vadd.f32 %v937, %v1005
    %v1007 = vpop.f32.mrb[0].mxu0
    %1008 = vdwg.mxu0
    %1009 = vst [vmem:[#allocation19] sm:$0xff] %v1006
    // Predicated region
    $region126: #{tpu_custom_call.1} parent=1 // pred_check
      _
    $region127: #{tpu_custom_call.1} parent=1 // pred_check_branch
      %1011 = sbr.rel (0) target = $region129
    $region128: #{tpu_custom_call.1} parent=1 // pred_region
      %s1013 = ssub.s32 128, 128
      %1014 = vsyncadd [#allocation4], %s1013
      %s1016 = sshll.u32 [#allocation19], 4
      %s1017 = int_to_ptr.vmem [resolvable:$true] %s1016
      %1019 = dma.vmem_to_hbm [thread:$0]  %s1017, 128, %s21, [#allocation4]
    $region129: #{tpu_custom_call.1} parent=1 // pred_fallthru
      _
    // Predicated region
    $region130: #{tpu_custom_call.1} parent=1 // pred_check
      _
    $region131: #{tpu_custom_call.1} parent=1 // pred_check_branch
      %1021 = sbr.rel (0) target = $region133
    $region132: #{tpu_custom_call.1} parent=1 // pred_region
      %s1023 = ssub.s32 128, 128
      %1024 = vsyncadd [#allocation21], %s1023
      %s1026 = sshll.u32 [#allocation20], 4
      %s1027 = int_to_ptr.vmem [resolvable:$true] %s1026
      %1029 = dma.vmem_to_hbm [thread:$0]  %s1027, 128, %s22, [#allocation21]
    $region133: #{tpu_custom_call.1} parent=1 // pred_fallthru
      _
    // Predicated region
    $region134: #{tpu_custom_call.1} parent=1 // pred_check
      _
    $region135: #{tpu_custom_call.1} parent=1 // pred_check_branch
      %1031 = sbr.rel (0) target = $region137
    $region136: #{tpu_custom_call.1} parent=1 // pred_region
      %1032 = dma.done [#allocation4], 128
    $region137: #{tpu_custom_call.1} parent=1 // pred_fallthru
      _
    // Predicated region
    $region138: #{tpu_custom_call.1} parent=1 // pred_check
      _
    $region139: #{tpu_custom_call.1} parent=1 // pred_check_branch
      %1034 = sbr.rel (0) target = $region141
    $region140: #{tpu_custom_call.1} parent=1 // pred_region
      %1035 = dma.done [#allocation21], 128
    $region141: #{tpu_custom_call.1} parent=1 // pred_fallthru
      _
    %1036 = vsyncpa [#allocation3], 1
    %1037 = vsyncpa [#allocation6], 1
    %1038 = vsyncpa [#allocation9], 1
    %1039 = vsyncpa [#allocation12], 1
    %1040 = vsyncpa [#allocation15], 1
    %1041 = vsyncpa [#allocation18], 1
    %1042 = vsyncpa [#allocation4], 1
    %1043 = vsyncpa [#allocation21], 1

</llo_original>
